<compile_context>
chip_gen: v7x
topology: tpu7x:2x2x1
jax: 0.10.0
libtpu: 0.0.40
codegen_flags: <defaults>
</compile_context>

<pallas_src>
import jax
import jax.numpy as jnp
from jax.experimental import pallas as pl
from jax.experimental.pallas import tpu as pltpu


# ----------------------------- Pallas kernel ------------------------------- #

def _dwconv_kernel(x_ref, w_ref, b_ref, o_ref, acc_ref):
    # x_ref  : (TB, H, W, C)   TB images, channels-last
    # w_ref  : (9, C)          tap (kh*3 + kw) x channel, float32
    # b_ref  : (1, C)          bias, float32
    # o_ref  : (TB, H, W, C)
    # acc_ref: (TB, H, W, C)   float32 accumulator scratch
    TB, H, W, C = x_ref.shape

    x = x_ref[...]                                   # (TB, H, W, C), input dtype
    w = w_ref[...]                                   # (9, C), VMEM-resident

    # Width (kw) shifted views, hoisted once and reused for all 3 kernel rows.
    # Built with a zero column + slice concat: no per-tap misaligned loads.
    zcol = jnp.zeros((TB, H, 1, C), x.dtype)
    x_wm1 = jnp.concatenate([zcol, x[:, :, :W - 1, :]], axis=2)  # x[..., w-1, :]
    x_wp1 = jnp.concatenate([x[:, :, 1:, :], zcol], axis=2)      # x[..., w+1, :]

    def row_taps(kh, rows):
        # Combined kw taps of kernel row `kh` over input rows `rows`.
        # Products promote to float32 because `w` is float32.
        return (x_wm1[:, rows] * w[kh * 3 + 0]
                + x[:, rows] * w[kh * 3 + 1]
                + x_wp1[:, rows] * w[kh * 3 + 2])

    # kh = 1 (same input row): initialises every output row (no zero-init needed).
    acc_ref[...] = row_taps(1, slice(0, H))
    if H > 1:
        # kh = 0: output row h uses input row h-1 (row 0 sees zero padding).
        acc_ref[:, 1:H] += row_taps(0, slice(0, H - 1))
        # kh = 2: output row h uses input row h+1 (row H-1 sees zero padding).
        acc_ref[:, 0:H - 1] += row_taps(2, slice(1, H))

    o_ref[...] = (acc_ref[...] + b_ref[...]).astype(o_ref.dtype)


# ------------------------------- wrapper ------------------------------------ #

def dwconv(x, weight, bias, H, W, *, target_block_bytes=1 << 20):
    """Depthwise 3x3 conv (stride 1, pad 1, groups=C) on a token tensor.

    x      : (B, N, C) with N == H*W (row-major)
    weight : (C, 1, 3, 3)  PyTorch Conv2d(groups=C) layout
    bias   : (C,)
    returns: (B, N, C)
    """
    B, N, C = x.shape
    assert N == H * W, "N must equal H*W"

    xi = x.reshape(B, H, W, C)                       # free row-major reshape
    w9 = weight.reshape(C, 9).T.astype(jnp.float32)  # (9, C) tap-major, channel-last
    b2 = bias.reshape(1, C).astype(jnp.float32)

    # Pack several images per pipelined block (~1 MiB) so DMAs are large enough
    # to approach the HBM bandwidth roofline; TB must divide B.
    per_image = H * W * C * x.dtype.itemsize
    tb = max(1, min(B, target_block_bytes // max(per_image, 1)))
    while B % tb:
        tb -= 1
    # TODO(synk): for very large H*W feature maps, add a second ("parallel")
    # H-strip grid axis with a 1-row halo instead of whole-image blocks.

    grid = (B // tb,)
    flops = 18 * B * H * W * C                       # 9 mul + 9 add per output
    bytes_accessed = 2 * B * H * W * C * x.dtype.itemsize

    out = pl.pallas_call(
        _dwconv_kernel,
        out_shape=jax.ShapeDtypeStruct((B, H, W, C), x.dtype),
        grid=grid,
        in_specs=[
            pl.BlockSpec((tb, H, W, C), lambda b: (b, 0, 0, 0)),
            pl.BlockSpec((9, C), lambda b: (0, 0)),
            pl.BlockSpec((1, C), lambda b: (0, 0)),
        ],
        out_specs=pl.BlockSpec((tb, H, W, C), lambda b: (b, 0, 0, 0)),
        scratch_shapes=[pltpu.VMEM((tb, H, W, C), jnp.float32)],
        compiler_params=pltpu.CompilerParams(
            dimension_semantics=("parallel",),
            vmem_limit_bytes=32 * 1024 * 1024),
        cost_estimate=pl.CostEstimate(
            flops=flops, transcendentals=0, bytes_accessed=bytes_accessed),
    )(xi, w9, b2)

    return out.reshape(B, N, C)


# ------------------------- pure-JAX reference ------------------------------ #

def reference(x, weight, bias, H, W):
    """Direct translation of nn.Conv2d(C, C, 3, 1, 1, groups=C) on (B,N,C)."""
    B, N, C = x.shape
    xi = x.reshape(B, H, W, C)
    xp = jnp.pad(xi, ((0, 0), (1, 1), (1, 1), (0, 0)))
    w = weight.reshape(C, 3, 3)                      # (C, kh, kw)
    out = jnp.zeros((B, H, W, C), jnp.float32)
    for kh in range(3):
        for kw in range(3):
            out = out + xp[:, kh:kh + H, kw:kw + W, :] * w[:, kh, kw]
    out = out + bias
    return out.reshape(B, N, C)


if __name__ == "__main__":
    # small shapes consistent with the module: tokens (B, N=H*W, C)
    dim = 128                # DAEFormer-like channel count; lane-dense (128)
    B, H, W = 2, 16, 16
    N = H * W

    key = jax.random.PRNGKey(0)
    kx, kw_, kb = jax.random.split(key, 3)
    x = jax.random.normal(kx, (B, N, dim), jnp.float32)
    # PyTorch depthwise weight layout: (C_out, C_in/groups=1, 3, 3)
    weight = 0.1 * jax.random.normal(kw_, (dim, 1, 3, 3), jnp.float32)
    bias = 0.1 * jax.random.normal(kb, (dim,), jnp.float32)

    out = dwconv(x, weight, bias, H, W)
    out = jax.block_until_ready(out)

    ref = reference(x, weight, bias, H, W)
    assert out.shape == (B, N, dim)
    assert jnp.allclose(out, ref, atol=1e-5, rtol=1e-5), "mismatch vs reference"

    print("KERNEL_OK")
</pallas_src>

<mosaic_0001>
module attributes {stable_mosaic.version = 11 : i64} {
  func.func @_dwconv_kernel(%arg0: i32, %arg1: memref<2x16x16x128xf32, #tpu.memory_space<vmem>>, %arg2: memref<9x128xf32, #tpu.memory_space<vmem>>, %arg3: memref<1x128xf32, #tpu.memory_space<vmem>>, %arg4: memref<2x16x16x128xf32, #tpu.memory_space<vmem>>, %arg5: memref<2x16x16x128xf32, #tpu.memory_space<vmem>>) attributes {dimension_semantics = [#tpu.dimension_semantics<parallel>], iteration_bounds = array<i64: 1>, scalar_prefetch = 0 : i64, scratch_operands = 1 : i64, tpu.core_type = #tpu.core_type<tc>, window_params = [{transform_indices = @transform_0, window_bounds = array<i64: 2, 16, 16, 128>}, {pipeline_mode = #tpu.pipeline_mode<synchronous>, transform_indices = @transform_1, window_bounds = array<i64: 9, 128>}, {pipeline_mode = #tpu.pipeline_mode<synchronous>, transform_indices = @transform_2, window_bounds = array<i64: 1, 128>}, {transform_indices = @transform_3, window_bounds = array<i64: 2, 16, 16, 128>}]} {
    %c0 = arith.constant 0 : index
    %c0_0 = arith.constant 0 : index
    %c0_1 = arith.constant 0 : index
    %c0_2 = arith.constant 0 : index
    %0 = vector.load %arg1[%c0, %c0_0, %c0_1, %c0_2] : memref<2x16x16x128xf32, #tpu.memory_space<vmem>>, vector<2x16x16x128xf32>
    %c0_3 = arith.constant 0 : index
    %c0_4 = arith.constant 0 : index
    %1 = vector.load %arg2[%c0_3, %c0_4] : memref<9x128xf32, #tpu.memory_space<vmem>>, vector<9x128xf32>
    %cst = arith.constant 0.000000e+00 : f32
    %2 = vector.broadcast %cst : f32 to vector<2x16x1x128xf32>
    %3 = vector.extract_strided_slice %0 {offsets = [0, 0, 0, 0], sizes = [2, 16, 15, 128], strides = [1, 1, 1, 1]} : vector<2x16x16x128xf32> to vector<2x16x15x128xf32>
    %4 = tpu.concatenate %2, %3 in 2 : vector<2x16x1x128xf32>, vector<2x16x15x128xf32> -> vector<2x16x16x128xf32>
    %5 = vector.extract_strided_slice %0 {offsets = [0, 0, 1, 0], sizes = [2, 16, 15, 128], strides = [1, 1, 1, 1]} : vector<2x16x16x128xf32> to vector<2x16x15x128xf32>
    %6 = tpu.concatenate %5, %2 in 2 : vector<2x16x15x128xf32>, vector<2x16x1x128xf32> -> vector<2x16x16x128xf32>
    %7 = vector.extract_strided_slice %1 {offsets = [3, 0], sizes = [1, 128], strides = [1, 1]} : vector<9x128xf32> to vector<1x128xf32>
    %8 = vector.shape_cast %7 : vector<1x128xf32> to vector<128xf32>
    %9 = vector.shape_cast %8 : vector<128xf32> to vector<1x1x1x128xf32>
    %10 = vector.broadcast %9 : vector<1x1x1x128xf32> to vector<2x16x16x128xf32>
    %11 = arith.mulf %4, %10 : vector<2x16x16x128xf32>
    %12 = vector.extract_strided_slice %1 {offsets = [4, 0], sizes = [1, 128], strides = [1, 1]} : vector<9x128xf32> to vector<1x128xf32>
    %13 = vector.shape_cast %12 : vector<1x128xf32> to vector<128xf32>
    %14 = vector.shape_cast %13 : vector<128xf32> to vector<1x1x1x128xf32>
    %15 = vector.broadcast %14 : vector<1x1x1x128xf32> to vector<2x16x16x128xf32>
    %16 = arith.mulf %0, %15 : vector<2x16x16x128xf32>
    %17 = arith.addf %11, %16 : vector<2x16x16x128xf32>
    %18 = vector.extract_strided_slice %1 {offsets = [5, 0], sizes = [1, 128], strides = [1, 1]} : vector<9x128xf32> to vector<1x128xf32>
    %19 = vector.shape_cast %18 : vector<1x128xf32> to vector<128xf32>
    %20 = vector.shape_cast %19 : vector<128xf32> to vector<1x1x1x128xf32>
    %21 = vector.broadcast %20 : vector<1x1x1x128xf32> to vector<2x16x16x128xf32>
    %22 = arith.mulf %6, %21 : vector<2x16x16x128xf32>
    %23 = arith.addf %17, %22 : vector<2x16x16x128xf32>
    %c0_5 = arith.constant 0 : index
    %c0_6 = arith.constant 0 : index
    %c0_7 = arith.constant 0 : index
    %c0_8 = arith.constant 0 : index
    %24 = vector.load %arg5[%c0_5, %c0_6, %c0_7, %c0_8] : memref<2x16x16x128xf32, #tpu.memory_space<vmem>>, vector<2x16x16x128xf32>
    tpu.vector_store %arg5[%c0_5, %c0_6, %c0_7, %c0_8], %23 {strides = array<i32>} : memref<2x16x16x128xf32, #tpu.memory_space<vmem>>, vector<2x16x16x128xf32>,
    %c0_9 = arith.constant 0 : index
    %c1 = arith.constant 1 : index
    %c0_10 = arith.constant 0 : index
    %c0_11 = arith.constant 0 : index
    %25 = vector.load %arg5[%c0_9, %c1, %c0_10, %c0_11] : memref<2x16x16x128xf32, #tpu.memory_space<vmem>>, vector<2x15x16x128xf32>
    %26 = vector.extract_strided_slice %4 {offsets = [0, 0, 0, 0], sizes = [2, 15, 16, 128], strides = [1, 1, 1, 1]} : vector<2x16x16x128xf32> to vector<2x15x16x128xf32>
    %27 = vector.extract_strided_slice %1 {offsets = [0, 0], sizes = [1, 128], strides = [1, 1]} : vector<9x128xf32> to vector<1x128xf32>
    %28 = vector.shape_cast %27 : vector<1x128xf32> to vector<128xf32>
    %29 = vector.shape_cast %28 : vector<128xf32> to vector<1x1x1x128xf32>
    %30 = vector.broadcast %29 : vector<1x1x1x128xf32> to vector<2x15x16x128xf32>
    %31 = arith.mulf %26, %30 : vector<2x15x16x128xf32>
    %32 = vector.extract_strided_slice %0 {offsets = [0, 0, 0, 0], sizes = [2, 15, 16, 128], strides = [1, 1, 1, 1]} : vector<2x16x16x128xf32> to vector<2x15x16x128xf32>
    %33 = vector.extract_strided_slice %1 {offsets = [1, 0], sizes = [1, 128], strides = [1, 1]} : vector<9x128xf32> to vector<1x128xf32>
    %34 = vector.shape_cast %33 : vector<1x128xf32> to vector<128xf32>
    %35 = vector.shape_cast %34 : vector<128xf32> to vector<1x1x1x128xf32>
    %36 = vector.broadcast %35 : vector<1x1x1x128xf32> to vector<2x15x16x128xf32>
    %37 = arith.mulf %32, %36 : vector<2x15x16x128xf32>
    %38 = arith.addf %31, %37 : vector<2x15x16x128xf32>
    %39 = vector.extract_strided_slice %6 {offsets = [0, 0, 0, 0], sizes = [2, 15, 16, 128], strides = [1, 1, 1, 1]} : vector<2x16x16x128xf32> to vector<2x15x16x128xf32>
    %40 = vector.extract_strided_slice %1 {offsets = [2, 0], sizes = [1, 128], strides = [1, 1]} : vector<9x128xf32> to vector<1x128xf32>
    %41 = vector.shape_cast %40 : vector<1x128xf32> to vector<128xf32>
    %42 = vector.shape_cast %41 : vector<128xf32> to vector<1x1x1x128xf32>
    %43 = vector.broadcast %42 : vector<1x1x1x128xf32> to vector<2x15x16x128xf32>
    %44 = arith.mulf %39, %43 : vector<2x15x16x128xf32>
    %45 = arith.addf %38, %44 : vector<2x15x16x128xf32>
    %46 = arith.addf %25, %45 : vector<2x15x16x128xf32>
    %c0_12 = arith.constant 0 : index
    %c1_13 = arith.constant 1 : index
    %c0_14 = arith.constant 0 : index
    %c0_15 = arith.constant 0 : index
    %47 = vector.load %arg5[%c0_12, %c1_13, %c0_14, %c0_15] : memref<2x16x16x128xf32, #tpu.memory_space<vmem>>, vector<2x15x16x128xf32>
    tpu.vector_store %arg5[%c0_12, %c1_13, %c0_14, %c0_15], %46 {strides = array<i32>} : memref<2x16x16x128xf32, #tpu.memory_space<vmem>>, vector<2x15x16x128xf32>,
    %c0_16 = arith.constant 0 : index
    %c0_17 = arith.constant 0 : index
    %c0_18 = arith.constant 0 : index
    %c0_19 = arith.constant 0 : index
    %48 = vector.load %arg5[%c0_16, %c0_17, %c0_18, %c0_19] : memref<2x16x16x128xf32, #tpu.memory_space<vmem>>, vector<2x15x16x128xf32>
    %49 = vector.extract_strided_slice %4 {offsets = [0, 1, 0, 0], sizes = [2, 15, 16, 128], strides = [1, 1, 1, 1]} : vector<2x16x16x128xf32> to vector<2x15x16x128xf32>
    %50 = vector.extract_strided_slice %1 {offsets = [6, 0], sizes = [1, 128], strides = [1, 1]} : vector<9x128xf32> to vector<1x128xf32>
    %51 = vector.shape_cast %50 : vector<1x128xf32> to vector<128xf32>
    %52 = vector.shape_cast %51 : vector<128xf32> to vector<1x1x1x128xf32>
    %53 = vector.broadcast %52 : vector<1x1x1x128xf32> to vector<2x15x16x128xf32>
    %54 = arith.mulf %49, %53 : vector<2x15x16x128xf32>
    %55 = vector.extract_strided_slice %0 {offsets = [0, 1, 0, 0], sizes = [2, 15, 16, 128], strides = [1, 1, 1, 1]} : vector<2x16x16x128xf32> to vector<2x15x16x128xf32>
    %56 = vector.extract_strided_slice %1 {offsets = [7, 0], sizes = [1, 128], strides = [1, 1]} : vector<9x128xf32> to vector<1x128xf32>
    %57 = vector.shape_cast %56 : vector<1x128xf32> to vector<128xf32>
    %58 = vector.shape_cast %57 : vector<128xf32> to vector<1x1x1x128xf32>
    %59 = vector.broadcast %58 : vector<1x1x1x128xf32> to vector<2x15x16x128xf32>
    %60 = arith.mulf %55, %59 : vector<2x15x16x128xf32>
    %61 = arith.addf %54, %60 : vector<2x15x16x128xf32>
    %62 = vector.extract_strided_slice %6 {offsets = [0, 1, 0, 0], sizes = [2, 15, 16, 128], strides = [1, 1, 1, 1]} : vector<2x16x16x128xf32> to vector<2x15x16x128xf32>
    %63 = vector.extract_strided_slice %1 {offsets = [8, 0], sizes = [1, 128], strides = [1, 1]} : vector<9x128xf32> to vector<1x128xf32>
    %64 = vector.shape_cast %63 : vector<1x128xf32> to vector<128xf32>
    %65 = vector.shape_cast %64 : vector<128xf32> to vector<1x1x1x128xf32>
    %66 = vector.broadcast %65 : vector<1x1x1x128xf32> to vector<2x15x16x128xf32>
    %67 = arith.mulf %62, %66 : vector<2x15x16x128xf32>
    %68 = arith.addf %61, %67 : vector<2x15x16x128xf32>
    %69 = arith.addf %48, %68 : vector<2x15x16x128xf32>
    %c0_20 = arith.constant 0 : index
    %c0_21 = arith.constant 0 : index
    %c0_22 = arith.constant 0 : index
    %c0_23 = arith.constant 0 : index
    %70 = vector.load %arg5[%c0_20, %c0_21, %c0_22, %c0_23] : memref<2x16x16x128xf32, #tpu.memory_space<vmem>>, vector<2x15x16x128xf32>
    tpu.vector_store %arg5[%c0_20, %c0_21, %c0_22, %c0_23], %69 {strides = array<i32>} : memref<2x16x16x128xf32, #tpu.memory_space<vmem>>, vector<2x15x16x128xf32>,
    %c0_24 = arith.constant 0 : index
    %c0_25 = arith.constant 0 : index
    %c0_26 = arith.constant 0 : index
    %c0_27 = arith.constant 0 : index
    %71 = vector.load %arg5[%c0_24, %c0_25, %c0_26, %c0_27] : memref<2x16x16x128xf32, #tpu.memory_space<vmem>>, vector<2x16x16x128xf32>
    %c0_28 = arith.constant 0 : index
    %c0_29 = arith.constant 0 : index
    %72 = vector.load %arg3[%c0_28, %c0_29] : memref<1x128xf32, #tpu.memory_space<vmem>>, vector<1x128xf32>
    %73 = vector.shape_cast %72 : vector<1x128xf32> to vector<1x1x1x128xf32>
    %74 = vector.broadcast %73 : vector<1x1x1x128xf32> to vector<2x16x16x128xf32>
    %75 = arith.addf %71, %74 : vector<2x16x16x128xf32>
    %c0_30 = arith.constant 0 : index
    %c0_31 = arith.constant 0 : index
    %c0_32 = arith.constant 0 : index
    %c0_33 = arith.constant 0 : index
    %76 = vector.load %arg4[%c0_30, %c0_31, %c0_32, %c0_33] : memref<2x16x16x128xf32, #tpu.memory_space<vmem>>, vector<2x16x16x128xf32>
    tpu.vector_store %arg4[%c0_30, %c0_31, %c0_32, %c0_33], %75 {strides = array<i32>} : memref<2x16x16x128xf32, #tpu.memory_space<vmem>>, vector<2x16x16x128xf32>,
    return
  }
  func.func @transform_0(%arg0: i32) -> (i32, i32, i32, i32) {
    %c0_i32 = arith.constant 0 : i32
    %c0_i32_0 = arith.constant 0 : i32
    %c0_i32_1 = arith.constant 0 : i32
    %c0_i32_2 = arith.constant 0 : i32
    return %arg0, %c0_i32, %c0_i32_0, %c0_i32_1 : i32, i32, i32, i32
  }
  func.func @transform_1(%arg0: i32) -> (i32, i32) {
    %c0_i32 = arith.constant 0 : i32
    %c0_i32_0 = arith.constant 0 : i32
    %c0_i32_1 = arith.constant 0 : i32
    return %c0_i32, %c0_i32_0 : i32, i32
  }
  func.func @transform_2(%arg0: i32) -> (i32, i32) {
    %c0_i32 = arith.constant 0 : i32
    %c0_i32_0 = arith.constant 0 : i32
    %c0_i32_1 = arith.constant 0 : i32
    return %c0_i32, %c0_i32_0 : i32, i32
  }
  func.func @transform_3(%arg0: i32) -> (i32, i32, i32, i32) {
    %c0_i32 = arith.constant 0 : i32
    %c0_i32_0 = arith.constant 0 : i32
    %c0_i32_1 = arith.constant 0 : i32
    %c0_i32_2 = arith.constant 0 : i32
    return %arg0, %c0_i32, %c0_i32_0, %c0_i32_1 : i32, i32, i32, i32
  }
}

</mosaic_0001>

<llo_original>
// kernel: tpu_custom_call.1
$region0: #{tpu_custom_call.1}
  #allocation0 [shape = 'u32[]', space=smem, size = 0x4, offset = 0x4, fixed_abs, tag = 'smem constant byte address 0x4 - core index']
  #allocation1 [shape = 'u32[144,128]{1,0:T(1,128)}', space=vmem, size = 0x12000, scoped, tag = 'internal scratch']
  #allocation2 [shape = 'f32[2,16,16,128]{3,2,1,0:T(8,128)}', space=vmem, size = 0x40000, scoped, tag = 'scratch operand']
  %s0 = inlined_call_operand.hbm [shape: f32[2,16,16,128], index: 0, kind: input, shape index: {}]
  %s1 = inlined_call_operand.hbm [shape: f32[9,128], index: 1, kind: input, shape index: {}]
  %s2 = inlined_call_operand.vmem [shape: f32[1,128], index: 2, kind: input, shape index: {}]
  %s3 = inlined_call_operand.hbm [shape: f32[2,16,16,128], index: 3, kind: output, shape index: {}]
  %s4 = sld [smem:[#allocation0]]
  $region30: #{tpu_custom_call.1} parent=0
    _
  %s6 = ssub.s32 1, %s4
  %s7 = scalar_select 0, %s6, %s4
  $region1: #{tpu_custom_call.1} parent=0
    #allocation3 [shape = 'u8[262144]{0}', space=vmem, size = 0x40000, scoped, tag = 'input window, operand 0, single buffered']
    #allocation4 [shape = 's32[1]{0}', space=sflag, size = 0x4, scoped, tag = 'scoped memory for tpu_custom_call.1']
    #allocation5 [shape = 's32[1]{0}', space=sflag, size = 0x4, scoped, tag = 'scoped memory for tpu_custom_call.1']
    #allocation6 [shape = 'u8[8192]{0}', space=vmem, size = 0x2000, scoped, tag = 'input window, operand 1, single buffered']
    #allocation7 [shape = 's32[1]{0}', space=sflag, size = 0x4, scoped, tag = 'scoped memory for tpu_custom_call.1']
    #allocation8 [shape = 'u8[262144]{0}', space=vmem, size = 0x40000, scoped, tag = 'output window, operand 0, single buffered']
    %8 = vsyncpa [#allocation4], 0
    %9 = vsyncpa [#allocation7], 0
    %10 = vsyncpa [#allocation5], 0
    // Predicated region
    $region2: #{tpu_custom_call.1} parent=1 // pred_check
      _
    $region3: #{tpu_custom_call.1} parent=1 // pred_check_branch
      %12 = sbr.rel (0) target = $region5
    $region4: #{tpu_custom_call.1} parent=1 // pred_region
      %s14 = ssub.s32 8192, 8192
      %15 = vsyncadd [#allocation4], %s14
      %s16 = sshll.u32 [#allocation3], 4
      %s17 = int_to_ptr.vmem [resolvable:$true] %s16
      %22 = dma.hbm_to_vmem [thread:$0]  %s0, 8192, %s17, [#allocation4], 128, 128, 8
    $region5: #{tpu_custom_call.1} parent=1 // pred_fallthru
      _
    // Predicated region
    $region6: #{tpu_custom_call.1} parent=1 // pred_check
      _
    $region7: #{tpu_custom_call.1} parent=1 // pred_check_branch
      %24 = sbr.rel (0) target = $region9
    $region8: #{tpu_custom_call.1} parent=1 // pred_region
      %s26 = ssub.s32 256, 256
      %27 = vsyncadd [#allocation7], %s26
      %s28 = sshll.u32 [#allocation6], 4
      %s29 = int_to_ptr.vmem [resolvable:$true] %s28
      %34 = dma.hbm_to_vmem [thread:$0]  %s1, 256, %s29, [#allocation7], 128, 128, 8
    $region9: #{tpu_custom_call.1} parent=1 // pred_fallthru
      _
    // Predicated region
    $region10: #{tpu_custom_call.1} parent=1 // pred_check
      _
    $region11: #{tpu_custom_call.1} parent=1 // pred_check_branch
      %36 = sbr.rel (0) target = $region13
    $region12: #{tpu_custom_call.1} parent=1 // pred_region
      _
    $region13: #{tpu_custom_call.1} parent=1 // pred_fallthru
      _
    // Predicated region
    $region14: #{tpu_custom_call.1} parent=1 // pred_check
      _
    $region15: #{tpu_custom_call.1} parent=1 // pred_check_branch
      %38 = sbr.rel (0) target = $region17
    $region16: #{tpu_custom_call.1} parent=1 // pred_region
      %39 = dma.done [#allocation4], 8192
    $region17: #{tpu_custom_call.1} parent=1 // pred_fallthru
      _
    // Predicated region
    $region18: #{tpu_custom_call.1} parent=1 // pred_check
      _
    $region19: #{tpu_custom_call.1} parent=1 // pred_check_branch
      %41 = sbr.rel (0) target = $region21
    $region20: #{tpu_custom_call.1} parent=1 // pred_region
      %42 = dma.done [#allocation7], 256
    $region21: #{tpu_custom_call.1} parent=1 // pred_fallthru
      _
    %v43 = vld [vmem:[#allocation3] sm:$0xff]
    %v44 = vld [vmem:[#allocation3 + $0x8] sm:$0xff]
    %v45 = vld [vmem:[#allocation3 + $0x10] sm:$0xff]
    %v46 = vld [vmem:[#allocation3 + $0x18] sm:$0xff]
    %v47 = vld [vmem:[#allocation3 + $0x20] sm:$0xff]
    %v48 = vld [vmem:[#allocation3 + $0x28] sm:$0xff]
    %v49 = vld [vmem:[#allocation3 + $0x30] sm:$0xff]
    %v50 = vld [vmem:[#allocation3 + $0x38] sm:$0xff]
    %v51 = vld [vmem:[#allocation3 + $0x40] sm:$0xff]
    %v52 = vld [vmem:[#allocation3 + $0x48] sm:$0xff]
    %v53 = vld [vmem:[#allocation3 + $0x50] sm:$0xff]
    %v54 = vld [vmem:[#allocation3 + $0x58] sm:$0xff]
    %v55 = vld [vmem:[#allocation3 + $0x60] sm:$0xff]
    %v56 = vld [vmem:[#allocation3 + $0x68] sm:$0xff]
    %v57 = vld [vmem:[#allocation3 + $0x70] sm:$0xff]
    %v58 = vld [vmem:[#allocation3 + $0x78] sm:$0xff]
    %v59 = vld [vmem:[#allocation3 + $0x80] sm:$0xff]
    %v60 = vld [vmem:[#allocation3 + $0x88] sm:$0xff]
    %v61 = vld [vmem:[#allocation3 + $0x90] sm:$0xff]
    %v62 = vld [vmem:[#allocation3 + $0x98] sm:$0xff]
    %v63 = vld [vmem:[#allocation3 + $0xa0] sm:$0xff]
    %v64 = vld [vmem:[#allocation3 + $0xa8] sm:$0xff]
    %v65 = vld [vmem:[#allocation3 + $0xb0] sm:$0xff]
    %v66 = vld [vmem:[#allocation3 + $0xb8] sm:$0xff]
    %v67 = vld [vmem:[#allocation3 + $0xc0] sm:$0xff]
    %v68 = vld [vmem:[#allocation3 + $0xc8] sm:$0xff]
    %v69 = vld [vmem:[#allocation3 + $0xd0] sm:$0xff]
    %v70 = vld [vmem:[#allocation3 + $0xd8] sm:$0xff]
    %v71 = vld [vmem:[#allocation3 + $0xe0] sm:$0xff]
    %v72 = vld [vmem:[#allocation3 + $0xe8] sm:$0xff]
    %v73 = vld [vmem:[#allocation3 + $0xf0] sm:$0xff]
    %v74 = vld [vmem:[#allocation3 + $0xf8] sm:$0xff]
    %v75 = vld [vmem:[#allocation3 + $0x100] sm:$0xff]
    %v76 = vld [vmem:[#allocation3 + $0x108] sm:$0xff]
    %v77 = vld [vmem:[#allocation3 + $0x110] sm:$0xff]
    %v78 = vld [vmem:[#allocation3 + $0x118] sm:$0xff]
    %v79 = vld [vmem:[#allocation3 + $0x120] sm:$0xff]
    %v80 = vld [vmem:[#allocation3 + $0x128] sm:$0xff]
    %v81 = vld [vmem:[#allocation3 + $0x130] sm:$0xff]
    %v82 = vld [vmem:[#allocation3 + $0x138] sm:$0xff]
    %v83 = vld [vmem:[#allocation3 + $0x140] sm:$0xff]
    %v84 = vld [vmem:[#allocation3 + $0x148] sm:$0xff]
    %v85 = vld [vmem:[#allocation3 + $0x150] sm:$0xff]
    %v86 = vld [vmem:[#allocation3 + $0x158] sm:$0xff]
    %v87 = vld [vmem:[#allocation3 + $0x160] sm:$0xff]
    %v88 = vld [vmem:[#allocation3 + $0x168] sm:$0xff]
    %v89 = vld [vmem:[#allocation3 + $0x170] sm:$0xff]
    %v90 = vld [vmem:[#allocation3 + $0x178] sm:$0xff]
    %v91 = vld [vmem:[#allocation3 + $0x180] sm:$0xff]
    %v92 = vld [vmem:[#allocation3 + $0x188] sm:$0xff]
    %v93 = vld [vmem:[#allocation3 + $0x190] sm:$0xff]
    %v94 = vld [vmem:[#allocation3 + $0x198] sm:$0xff]
    %v95 = vld [vmem:[#allocation3 + $0x1a0] sm:$0xff]
    %v96 = vld [vmem:[#allocation3 + $0x1a8] sm:$0xff]
    %v97 = vld [vmem:[#allocation3 + $0x1b0] sm:$0xff]
    %v98 = vld [vmem:[#allocation3 + $0x1b8] sm:$0xff]
    %v99 = vld [vmem:[#allocation3 + $0x1c0] sm:$0xff]
    %v100 = vld [vmem:[#allocation3 + $0x1c8] sm:$0xff]
    %v101 = vld [vmem:[#allocation3 + $0x1d0] sm:$0xff]
    %v102 = vld [vmem:[#allocation3 + $0x1d8] sm:$0xff]
    %v103 = vld [vmem:[#allocation3 + $0x1e0] sm:$0xff]
    %v104 = vld [vmem:[#allocation3 + $0x1e8] sm:$0xff]
    %v105 = vld [vmem:[#allocation3 + $0x1f0] sm:$0xff]
    %v106 = vld [vmem:[#allocation3 + $0x1f8] sm:$0xff]
    %v107 = vld [vmem:[#allocation6] sm:$0xff]
    %v108 = vld [vmem:[#allocation6 + $0x8] sm:$0x1]
    %vm173 = vcmask 1040384
    %v174 = vrot.slane %v43, 7
    %v175 = vrot.slane %v44, 7
    %v176 = vsel %vm173, %v174, %v175
    %v177 = vrot.slane %v45, 7
    %v178 = vrot.slane %v46, 7
    %v179 = vsel %vm173, %v177, %v178
    %v180 = vrot.slane %v47, 7
    %v181 = vrot.slane %v48, 7
    %v182 = vsel %vm173, %v180, %v181
    %v183 = vrot.slane %v49, 7
    %v184 = vrot.slane %v50, 7
    %v185 = vsel %vm173, %v183, %v184
    %v186 = vrot.slane %v51, 7
    %v187 = vrot.slane %v52, 7
    %v188 = vsel %vm173, %v186, %v187
    %v189 = vrot.slane %v53, 7
    %v190 = vrot.slane %v54, 7
    %v191 = vsel %vm173, %v189, %v190
    %v192 = vrot.slane %v55, 7
    %v193 = vrot.slane %v56, 7
    %v194 = vsel %vm173, %v192, %v193
    %v195 = vrot.slane %v57, 7
    %v196 = vrot.slane %v58, 7
    %v197 = vsel %vm173, %v195, %v196
    %v198 = vrot.slane %v59, 7
    %v199 = vrot.slane %v60, 7
    %v200 = vsel %vm173, %v198, %v199
    %v201 = vrot.slane %v61, 7
    %v202 = vrot.slane %v62, 7
    %v203 = vsel %vm173, %v201, %v202
    %v204 = vrot.slane %v63, 7
    %v205 = vrot.slane %v64, 7
    %v206 = vsel %vm173, %v204, %v205
    %v207 = vrot.slane %v65, 7
    %v208 = vrot.slane %v66, 7
    %v209 = vsel %vm173, %v207, %v208
    %v210 = vrot.slane %v67, 7
    %v211 = vrot.slane %v68, 7
    %v212 = vsel %vm173, %v210, %v211
    %v213 = vrot.slane %v69, 7
    %v214 = vrot.slane %v70, 7
    %v215 = vsel %vm173, %v213, %v214
    %v216 = vrot.slane %v71, 7
    %v217 = vrot.slane %v72, 7
    %v218 = vsel %vm173, %v216, %v217
    %v219 = vrot.slane %v73, 7
    %v220 = vrot.slane %v74, 7
    %v221 = vsel %vm173, %v219, %v220
    %v222 = vrot.slane %v75, 7
    %v223 = vrot.slane %v76, 7
    %v224 = vsel %vm173, %v222, %v223
    %v225 = vrot.slane %v77, 7
    %v226 = vrot.slane %v78, 7
    %v227 = vsel %vm173, %v225, %v226
    %v228 = vrot.slane %v79, 7
    %v229 = vrot.slane %v80, 7
    %v230 = vsel %vm173, %v228, %v229
    %v231 = vrot.slane %v81, 7
    %v232 = vrot.slane %v82, 7
    %v233 = vsel %vm173, %v231, %v232
    %v234 = vrot.slane %v83, 7
    %v235 = vrot.slane %v84, 7
    %v236 = vsel %vm173, %v234, %v235
    %v237 = vrot.slane %v85, 7
    %v238 = vrot.slane %v86, 7
    %v239 = vsel %vm173, %v237, %v238
    %v240 = vrot.slane %v87, 7
    %v241 = vrot.slane %v88, 7
    %v242 = vsel %vm173, %v240, %v241
    %v243 = vrot.slane %v89, 7
    %v244 = vrot.slane %v90, 7
    %v245 = vsel %vm173, %v243, %v244
    %v246 = vrot.slane %v91, 7
    %v247 = vrot.slane %v92, 7
    %v248 = vsel %vm173, %v246, %v247
    %v249 = vrot.slane %v93, 7
    %v250 = vrot.slane %v94, 7
    %v251 = vsel %vm173, %v249, %v250
    %v252 = vrot.slane %v95, 7
    %v253 = vrot.slane %v96, 7
    %v254 = vsel %vm173, %v252, %v253
    %v255 = vrot.slane %v97, 7
    %v256 = vrot.slane %v98, 7
    %v257 = vsel %vm173, %v255, %v256
    %v258 = vrot.slane %v99, 7
    %v259 = vrot.slane %v100, 7
    %v260 = vsel %vm173, %v258, %v259
    %v261 = vrot.slane %v101, 7
    %v262 = vrot.slane %v102, 7
    %v263 = vsel %vm173, %v261, %v262
    %v264 = vrot.slane %v103, 7
    %v265 = vrot.slane %v104, 7
    %v266 = vsel %vm173, %v264, %v265
    %v267 = vrot.slane %v105, 7
    %v268 = vrot.slane %v106, 7
    %v269 = vsel %vm173, %v267, %v268
    %v334 = vsel %vm173, 0.0, %v174
    %v335 = vsel %vm173, 0.0, %v177
    %v336 = vsel %vm173, 0.0, %v180
    %v337 = vsel %vm173, 0.0, %v183
    %v338 = vsel %vm173, 0.0, %v186
    %v339 = vsel %vm173, 0.0, %v189
    %v340 = vsel %vm173, 0.0, %v192
    %v341 = vsel %vm173, 0.0, %v195
    %v342 = vsel %vm173, 0.0, %v198
    %v343 = vsel %vm173, 0.0, %v201
    %v344 = vsel %vm173, 0.0, %v204
    %v345 = vsel %vm173, 0.0, %v207
    %v346 = vsel %vm173, 0.0, %v210
    %v347 = vsel %vm173, 0.0, %v213
    %v348 = vsel %vm173, 0.0, %v216
    %v349 = vsel %vm173, 0.0, %v219
    %v350 = vsel %vm173, 0.0, %v222
    %v351 = vsel %vm173, 0.0, %v225
    %v352 = vsel %vm173, 0.0, %v228
    %v353 = vsel %vm173, 0.0, %v231
    %v354 = vsel %vm173, 0.0, %v234
    %v355 = vsel %vm173, 0.0, %v237
    %v356 = vsel %vm173, 0.0, %v240
    %v357 = vsel %vm173, 0.0, %v243
    %v358 = vsel %vm173, 0.0, %v246
    %v359 = vsel %vm173, 0.0, %v249
    %v360 = vsel %vm173, 0.0, %v252
    %v361 = vsel %vm173, 0.0, %v255
    %v362 = vsel %vm173, 0.0, %v258
    %v363 = vsel %vm173, 0.0, %v261
    %v364 = vsel %vm173, 0.0, %v264
    %v365 = vsel %vm173, 0.0, %v267
    %vm366 = vcmask 1046528
    %v367 = vrot.slane %v43, 1
    %v368 = vrot.slane %v44, 1
    %v369 = vsel %vm366, %v367, %v368
    %v370 = vrot.slane %v45, 1
    %v371 = vrot.slane %v46, 1
    %v372 = vsel %vm366, %v370, %v371
    %v373 = vrot.slane %v47, 1
    %v374 = vrot.slane %v48, 1
    %v375 = vsel %vm366, %v373, %v374
    %v376 = vrot.slane %v49, 1
    %v377 = vrot.slane %v50, 1
    %v378 = vsel %vm366, %v376, %v377
    %v379 = vrot.slane %v51, 1
    %v380 = vrot.slane %v52, 1
    %v381 = vsel %vm366, %v379, %v380
    %v382 = vrot.slane %v53, 1
    %v383 = vrot.slane %v54, 1
    %v384 = vsel %vm366, %v382, %v383
    %v385 = vrot.slane %v55, 1
    %v386 = vrot.slane %v56, 1
    %v387 = vsel %vm366, %v385, %v386
    %v388 = vrot.slane %v57, 1
    %v389 = vrot.slane %v58, 1
    %v390 = vsel %vm366, %v388, %v389
    %v391 = vrot.slane %v59, 1
    %v392 = vrot.slane %v60, 1
    %v393 = vsel %vm366, %v391, %v392
    %v394 = vrot.slane %v61, 1
    %v395 = vrot.slane %v62, 1
    %v396 = vsel %vm366, %v394, %v395
    %v397 = vrot.slane %v63, 1
    %v398 = vrot.slane %v64, 1
    %v399 = vsel %vm366, %v397, %v398
    %v400 = vrot.slane %v65, 1
    %v401 = vrot.slane %v66, 1
    %v402 = vsel %vm366, %v400, %v401
    %v403 = vrot.slane %v67, 1
    %v404 = vrot.slane %v68, 1
    %v405 = vsel %vm366, %v403, %v404
    %v406 = vrot.slane %v69, 1
    %v407 = vrot.slane %v70, 1
    %v408 = vsel %vm366, %v406, %v407
    %v409 = vrot.slane %v71, 1
    %v410 = vrot.slane %v72, 1
    %v411 = vsel %vm366, %v409, %v410
    %v412 = vrot.slane %v73, 1
    %v413 = vrot.slane %v74, 1
    %v414 = vsel %vm366, %v412, %v413
    %v415 = vrot.slane %v75, 1
    %v416 = vrot.slane %v76, 1
    %v417 = vsel %vm366, %v415, %v416
    %v418 = vrot.slane %v77, 1
    %v419 = vrot.slane %v78, 1
    %v420 = vsel %vm366, %v418, %v419
    %v421 = vrot.slane %v79, 1
    %v422 = vrot.slane %v80, 1
    %v423 = vsel %vm366, %v421, %v422
    %v424 = vrot.slane %v81, 1
    %v425 = vrot.slane %v82, 1
    %v426 = vsel %vm366, %v424, %v425
    %v427 = vrot.slane %v83, 1
    %v428 = vrot.slane %v84, 1
    %v429 = vsel %vm366, %v427, %v428
    %v430 = vrot.slane %v85, 1
    %v431 = vrot.slane %v86, 1
    %v432 = vsel %vm366, %v430, %v431
    %v433 = vrot.slane %v87, 1
    %v434 = vrot.slane %v88, 1
    %v435 = vsel %vm366, %v433, %v434
    %v436 = vrot.slane %v89, 1
    %v437 = vrot.slane %v90, 1
    %v438 = vsel %vm366, %v436, %v437
    %v439 = vrot.slane %v91, 1
    %v440 = vrot.slane %v92, 1
    %v441 = vsel %vm366, %v439, %v440
    %v442 = vrot.slane %v93, 1
    %v443 = vrot.slane %v94, 1
    %v444 = vsel %vm366, %v442, %v443
    %v445 = vrot.slane %v95, 1
    %v446 = vrot.slane %v96, 1
    %v447 = vsel %vm366, %v445, %v446
    %v448 = vrot.slane %v97, 1
    %v449 = vrot.slane %v98, 1
    %v450 = vsel %vm366, %v448, %v449
    %v451 = vrot.slane %v99, 1
    %v452 = vrot.slane %v100, 1
    %v453 = vsel %vm366, %v451, %v452
    %v454 = vrot.slane %v101, 1
    %v455 = vrot.slane %v102, 1
    %v456 = vsel %vm366, %v454, %v455
    %v457 = vrot.slane %v103, 1
    %v458 = vrot.slane %v104, 1
    %v459 = vsel %vm366, %v457, %v458
    %v460 = vrot.slane %v105, 1
    %v461 = vrot.slane %v106, 1
    %v462 = vsel %vm366, %v460, %v461
    %v527 = vsel %vm366, %v368, 0.0
    %v528 = vsel %vm366, %v371, 0.0
    %v529 = vsel %vm366, %v374, 0.0
    %v530 = vsel %vm366, %v377, 0.0
    %v531 = vsel %vm366, %v380, 0.0
    %v532 = vsel %vm366, %v383, 0.0
    %v533 = vsel %vm366, %v386, 0.0
    %v534 = vsel %vm366, %v389, 0.0
    %v535 = vsel %vm366, %v392, 0.0
    %v536 = vsel %vm366, %v395, 0.0
    %v537 = vsel %vm366, %v398, 0.0
    %v538 = vsel %vm366, %v401, 0.0
    %v539 = vsel %vm366, %v404, 0.0
    %v540 = vsel %vm366, %v407, 0.0
    %v541 = vsel %vm366, %v410, 0.0
    %v542 = vsel %vm366, %v413, 0.0
    %v543 = vsel %vm366, %v416, 0.0
    %v544 = vsel %vm366, %v419, 0.0
    %v545 = vsel %vm366, %v422, 0.0
    %v546 = vsel %vm366, %v425, 0.0
    %v547 = vsel %vm366, %v428, 0.0
    %v548 = vsel %vm366, %v431, 0.0
    %v549 = vsel %vm366, %v434, 0.0
    %v550 = vsel %vm366, %v437, 0.0
    %v551 = vsel %vm366, %v440, 0.0
    %v552 = vsel %vm366, %v443, 0.0
    %v553 = vsel %vm366, %v446, 0.0
    %v554 = vsel %vm366, %v449, 0.0
    %v555 = vsel %vm366, %v452, 0.0
    %v556 = vsel %vm366, %v455, 0.0
    %v557 = vsel %vm366, %v458, 0.0
    %v558 = vsel %vm366, %v461, 0.0
    %v559 = vlaneseq
    %v560 = vshrl.u32 %v559, 7
    %v561 = vsub.s32 3, %v560
    %v562 = vrot.slane %v107, %v561
    %v563 = vmul.f32 %v334, %v562
    %v564 = vmul.f32 %v176, %v562
    %v565 = vmul.f32 %v335, %v562
    %v566 = vmul.f32 %v179, %v562
    %v567 = vmul.f32 %v336, %v562
    %v568 = vmul.f32 %v182, %v562
    %v569 = vmul.f32 %v337, %v562
    %v570 = vmul.f32 %v185, %v562
    %v571 = vmul.f32 %v338, %v562
    %v572 = vmul.f32 %v188, %v562
    %v573 = vmul.f32 %v339, %v562
    %v574 = vmul.f32 %v191, %v562
    %v575 = vmul.f32 %v340, %v562
    %v576 = vmul.f32 %v194, %v562
    %v577 = vmul.f32 %v341, %v562
    %v578 = vmul.f32 %v197, %v562
    %v579 = vmul.f32 %v342, %v562
    %v580 = vmul.f32 %v200, %v562
    %v581 = vmul.f32 %v343, %v562
    %v582 = vmul.f32 %v203, %v562
    %v583 = vmul.f32 %v344, %v562
    %v584 = vmul.f32 %v206, %v562
    %v585 = vmul.f32 %v345, %v562
    %v586 = vmul.f32 %v209, %v562
    %v587 = vmul.f32 %v346, %v562
    %v588 = vmul.f32 %v212, %v562
    %v589 = vmul.f32 %v347, %v562
    %v590 = vmul.f32 %v215, %v562
    %v591 = vmul.f32 %v348, %v562
    %v592 = vmul.f32 %v218, %v562
    %v593 = vmul.f32 %v349, %v562
    %v594 = vmul.f32 %v221, %v562
    %v595 = vmul.f32 %v350, %v562
    %v596 = vmul.f32 %v224, %v562
    %v597 = vmul.f32 %v351, %v562
    %v598 = vmul.f32 %v227, %v562
    %v599 = vmul.f32 %v352, %v562
    %v600 = vmul.f32 %v230, %v562
    %v601 = vmul.f32 %v353, %v562
    %v602 = vmul.f32 %v233, %v562
    %v603 = vmul.f32 %v354, %v562
    %v604 = vmul.f32 %v236, %v562
    %v605 = vmul.f32 %v355, %v562
    %v606 = vmul.f32 %v239, %v562
    %v607 = vmul.f32 %v356, %v562
    %v608 = vmul.f32 %v242, %v562
    %v609 = vmul.f32 %v357, %v562
    %v610 = vmul.f32 %v245, %v562
    %v611 = vmul.f32 %v358, %v562
    %v612 = vmul.f32 %v248, %v562
    %v613 = vmul.f32 %v359, %v562
    %v614 = vmul.f32 %v251, %v562
    %v615 = vmul.f32 %v360, %v562
    %v616 = vmul.f32 %v254, %v562
    %v617 = vmul.f32 %v361, %v562
    %v618 = vmul.f32 %v257, %v562
    %v619 = vmul.f32 %v362, %v562
    %v620 = vmul.f32 %v260, %v562
    %v621 = vmul.f32 %v363, %v562
    %v622 = vmul.f32 %v263, %v562
    %v623 = vmul.f32 %v364, %v562
    %v624 = vmul.f32 %v266, %v562
    %v625 = vmul.f32 %v365, %v562
    %v626 = vmul.f32 %v269, %v562
    %v627 = vlaneseq
    %v628 = vshrl.u32 %v627, 7
    %v629 = vsub.s32 4, %v628
    %v630 = vrot.slane %v107, %v629
    %v631 = vmul.f32 %v43, %v630
    %v632 = vmul.f32 %v44, %v630
    %v633 = vmul.f32 %v45, %v630
    %v634 = vmul.f32 %v46, %v630
    %v635 = vmul.f32 %v47, %v630
    %v636 = vmul.f32 %v48, %v630
    %v637 = vmul.f32 %v49, %v630
    %v638 = vmul.f32 %v50, %v630
    %v639 = vmul.f32 %v51, %v630
    %v640 = vmul.f32 %v52, %v630
    %v641 = vmul.f32 %v53, %v630
    %v642 = vmul.f32 %v54, %v630
    %v643 = vmul.f32 %v55, %v630
    %v644 = vmul.f32 %v56, %v630
    %v645 = vmul.f32 %v57, %v630
    %v646 = vmul.f32 %v58, %v630
    %v647 = vmul.f32 %v59, %v630
    %v648 = vmul.f32 %v60, %v630
    %v649 = vmul.f32 %v61, %v630
    %v650 = vmul.f32 %v62, %v630
    %v651 = vmul.f32 %v63, %v630
    %v652 = vmul.f32 %v64, %v630
    %v653 = vmul.f32 %v65, %v630
    %v654 = vmul.f32 %v66, %v630
    %v655 = vmul.f32 %v67, %v630
    %v656 = vmul.f32 %v68, %v630
    %v657 = vmul.f32 %v69, %v630
    %v658 = vmul.f32 %v70, %v630
    %v659 = vmul.f32 %v71, %v630
    %v660 = vmul.f32 %v72, %v630
    %v661 = vmul.f32 %v73, %v630
    %v662 = vmul.f32 %v74, %v630
    %v663 = vmul.f32 %v75, %v630
    %v664 = vmul.f32 %v76, %v630
    %v665 = vmul.f32 %v77, %v630
    %v666 = vmul.f32 %v78, %v630
    %v667 = vmul.f32 %v79, %v630
    %v668 = vmul.f32 %v80, %v630
    %v669 = vmul.f32 %v81, %v630
    %v670 = vmul.f32 %v82, %v630
    %v671 = vmul.f32 %v83, %v630
    %v672 = vmul.f32 %v84, %v630
    %v673 = vmul.f32 %v85, %v630
    %v674 = vmul.f32 %v86, %v630
    %v675 = vmul.f32 %v87, %v630
    %v676 = vmul.f32 %v88, %v630
    %v677 = vmul.f32 %v89, %v630
    %v678 = vmul.f32 %v90, %v630
    %v679 = vmul.f32 %v91, %v630
    %v680 = vmul.f32 %v92, %v630
    %v681 = vmul.f32 %v93, %v630
    %v682 = vmul.f32 %v94, %v630
    %v683 = vmul.f32 %v95, %v630
    %v684 = vmul.f32 %v96, %v630
    %v685 = vmul.f32 %v97, %v630
    %v686 = vmul.f32 %v98, %v630
    %v687 = vmul.f32 %v99, %v630
    %v688 = vmul.f32 %v100, %v630
    %v689 = vmul.f32 %v101, %v630
    %v690 = vmul.f32 %v102, %v630
    %v691 = vmul.f32 %v103, %v630
    %v692 = vmul.f32 %v104, %v630
    %v693 = vmul.f32 %v105, %v630
    %v694 = vmul.f32 %v106, %v630
    %v695 = vadd.f32 %v563, %v631
    %v696 = vadd.f32 %v564, %v632
    %v697 = vadd.f32 %v565, %v633
    %v698 = vadd.f32 %v566, %v634
    %v699 = vadd.f32 %v567, %v635
    %v700 = vadd.f32 %v568, %v636
    %v701 = vadd.f32 %v569, %v637
    %v702 = vadd.f32 %v570, %v638
    %v703 = vadd.f32 %v571, %v639
    %v704 = vadd.f32 %v572, %v640
    %v705 = vadd.f32 %v573, %v641
    %v706 = vadd.f32 %v574, %v642
    %v707 = vadd.f32 %v575, %v643
    %v708 = vadd.f32 %v576, %v644
    %v709 = vadd.f32 %v577, %v645
    %v710 = vadd.f32 %v578, %v646
    %v711 = vadd.f32 %v579, %v647
    %v712 = vadd.f32 %v580, %v648
    %v713 = vadd.f32 %v581, %v649
    %v714 = vadd.f32 %v582, %v650
    %v715 = vadd.f32 %v583, %v651
    %v716 = vadd.f32 %v584, %v652
    %v717 = vadd.f32 %v585, %v653
    %v718 = vadd.f32 %v586, %v654
    %v719 = vadd.f32 %v587, %v655
    %v720 = vadd.f32 %v588, %v656
    %v721 = vadd.f32 %v589, %v657
    %v722 = vadd.f32 %v590, %v658
    %v723 = vadd.f32 %v591, %v659
    %v724 = vadd.f32 %v592, %v660
    %v725 = vadd.f32 %v593, %v661
    %v726 = vadd.f32 %v594, %v662
    %v727 = vadd.f32 %v595, %v663
    %v728 = vadd.f32 %v596, %v664
    %v729 = vadd.f32 %v597, %v665
    %v730 = vadd.f32 %v598, %v666
    %v731 = vadd.f32 %v599, %v667
    %v732 = vadd.f32 %v600, %v668
    %v733 = vadd.f32 %v601, %v669
    %v734 = vadd.f32 %v602, %v670
    %v735 = vadd.f32 %v603, %v671
    %v736 = vadd.f32 %v604, %v672
    %v737 = vadd.f32 %v605, %v673
    %v738 = vadd.f32 %v606, %v674
    %v739 = vadd.f32 %v607, %v675
    %v740 = vadd.f32 %v608, %v676
    %v741 = vadd.f32 %v609, %v677
    %v742 = vadd.f32 %v610, %v678
    %v743 = vadd.f32 %v611, %v679
    %v744 = vadd.f32 %v612, %v680
    %v745 = vadd.f32 %v613, %v681
    %v746 = vadd.f32 %v614, %v682
    %v747 = vadd.f32 %v615, %v683
    %v748 = vadd.f32 %v616, %v684
    %v749 = vadd.f32 %v617, %v685
    %v750 = vadd.f32 %v618, %v686
    %v751 = vadd.f32 %v619, %v687
    %v752 = vadd.f32 %v620, %v688
    %v753 = vadd.f32 %v621, %v689
    %v754 = vadd.f32 %v622, %v690
    %v755 = vadd.f32 %v623, %v691
    %v756 = vadd.f32 %v624, %v692
    %v757 = vadd.f32 %v625, %v693
    %v758 = vadd.f32 %v626, %v694
    %v759 = vlaneseq
    %v760 = vshrl.u32 %v759, 7
    %v761 = vsub.s32 5, %v760
    %v762 = vrot.slane %v107, %v761
    %v763 = vmul.f32 %v369, %v762
    %v764 = vmul.f32 %v527, %v762
    %v765 = vmul.f32 %v372, %v762
    %v766 = vmul.f32 %v528, %v762
    %v767 = vmul.f32 %v375, %v762
    %v768 = vmul.f32 %v529, %v762
    %v769 = vmul.f32 %v378, %v762
    %v770 = vmul.f32 %v530, %v762
    %v771 = vmul.f32 %v381, %v762
    %v772 = vmul.f32 %v531, %v762
    %v773 = vmul.f32 %v384, %v762
    %v774 = vmul.f32 %v532, %v762
    %v775 = vmul.f32 %v387, %v762
    %v776 = vmul.f32 %v533, %v762
    %v777 = vmul.f32 %v390, %v762
    %v778 = vmul.f32 %v534, %v762
    %v779 = vmul.f32 %v393, %v762
    %v780 = vmul.f32 %v535, %v762
    %v781 = vmul.f32 %v396, %v762
    %v782 = vmul.f32 %v536, %v762
    %v783 = vmul.f32 %v399, %v762
    %v784 = vmul.f32 %v537, %v762
    %v785 = vmul.f32 %v402, %v762
    %v786 = vmul.f32 %v538, %v762
    %v787 = vmul.f32 %v405, %v762
    %v788 = vmul.f32 %v539, %v762
    %v789 = vmul.f32 %v408, %v762
    %v790 = vmul.f32 %v540, %v762
    %v791 = vmul.f32 %v411, %v762
    %v792 = vmul.f32 %v541, %v762
    %v793 = vmul.f32 %v414, %v762
    %v794 = vmul.f32 %v542, %v762
    %v795 = vmul.f32 %v417, %v762
    %v796 = vmul.f32 %v543, %v762
    %v797 = vmul.f32 %v420, %v762
    %v798 = vmul.f32 %v544, %v762
    %v799 = vmul.f32 %v423, %v762
    %v800 = vmul.f32 %v545, %v762
    %v801 = vmul.f32 %v426, %v762
    %v802 = vmul.f32 %v546, %v762
    %v803 = vmul.f32 %v429, %v762
    %v804 = vmul.f32 %v547, %v762
    %v805 = vmul.f32 %v432, %v762
    %v806 = vmul.f32 %v548, %v762
    %v807 = vmul.f32 %v435, %v762
    %v808 = vmul.f32 %v549, %v762
    %v809 = vmul.f32 %v438, %v762
    %v810 = vmul.f32 %v550, %v762
    %v811 = vmul.f32 %v441, %v762
    %v812 = vmul.f32 %v551, %v762
    %v813 = vmul.f32 %v444, %v762
    %v814 = vmul.f32 %v552, %v762
    %v815 = vmul.f32 %v447, %v762
    %v816 = vmul.f32 %v553, %v762
    %v817 = vmul.f32 %v450, %v762
    %v818 = vmul.f32 %v554, %v762
    %v819 = vmul.f32 %v453, %v762
    %v820 = vmul.f32 %v555, %v762
    %v821 = vmul.f32 %v456, %v762
    %v822 = vmul.f32 %v556, %v762
    %v823 = vmul.f32 %v459, %v762
    %v824 = vmul.f32 %v557, %v762
    %v825 = vmul.f32 %v462, %v762
    %v826 = vmul.f32 %v558, %v762
    %v827 = vadd.f32 %v695, %v763
    %v828 = vadd.f32 %v696, %v764
    %v829 = vadd.f32 %v697, %v765
    %v830 = vadd.f32 %v698, %v766
    %v831 = vadd.f32 %v699, %v767
    %v832 = vadd.f32 %v700, %v768
    %v833 = vadd.f32 %v701, %v769
    %v834 = vadd.f32 %v702, %v770
    %v835 = vadd.f32 %v703, %v771
    %v836 = vadd.f32 %v704, %v772
    %v837 = vadd.f32 %v705, %v773
    %v838 = vadd.f32 %v706, %v774
    %v839 = vadd.f32 %v707, %v775
    %v840 = vadd.f32 %v708, %v776
    %v841 = vadd.f32 %v709, %v777
    %v842 = vadd.f32 %v710, %v778
    %v843 = vadd.f32 %v711, %v779
    %v844 = vadd.f32 %v712, %v780
    %v845 = vadd.f32 %v713, %v781
    %v846 = vadd.f32 %v714, %v782
    %v847 = vadd.f32 %v715, %v783
    %v848 = vadd.f32 %v716, %v784
    %v849 = vadd.f32 %v717, %v785
    %v850 = vadd.f32 %v718, %v786
    %v851 = vadd.f32 %v719, %v787
    %v852 = vadd.f32 %v720, %v788
    %v853 = vadd.f32 %v721, %v789
    %v854 = vadd.f32 %v722, %v790
    %v855 = vadd.f32 %v723, %v791
    %v856 = vadd.f32 %v724, %v792
    %v857 = vadd.f32 %v725, %v793
    %v858 = vadd.f32 %v726, %v794
    %v859 = vadd.f32 %v727, %v795
    %v860 = vadd.f32 %v728, %v796
    %v861 = vadd.f32 %v729, %v797
    %v862 = vadd.f32 %v730, %v798
    %v863 = vadd.f32 %v731, %v799
    %v864 = vadd.f32 %v732, %v800
    %v865 = vadd.f32 %v733, %v801
    %v866 = vadd.f32 %v734, %v802
    %v867 = vadd.f32 %v735, %v803
    %v868 = vadd.f32 %v736, %v804
    %v869 = vadd.f32 %v737, %v805
    %v870 = vadd.f32 %v738, %v806
    %v871 = vadd.f32 %v739, %v807
    %v872 = vadd.f32 %v740, %v808
    %v873 = vadd.f32 %v741, %v809
    %v874 = vadd.f32 %v742, %v810
    %v875 = vadd.f32 %v743, %v811
    %v876 = vadd.f32 %v744, %v812
    %v877 = vadd.f32 %v745, %v813
    %v878 = vadd.f32 %v746, %v814
    %v879 = vadd.f32 %v747, %v815
    %v880 = vadd.f32 %v748, %v816
    %v881 = vadd.f32 %v749, %v817
    %v882 = vadd.f32 %v750, %v818
    %v883 = vadd.f32 %v751, %v819
    %v884 = vadd.f32 %v752, %v820
    %v885 = vadd.f32 %v753, %v821
    %v886 = vadd.f32 %v754, %v822
    %v887 = vadd.f32 %v755, %v823
    %v888 = vadd.f32 %v756, %v824
    %v889 = vadd.f32 %v757, %v825
    %v890 = vadd.f32 %v758, %v826
    %891 = vst [vmem:[#allocation2] sm:$0xff] %v827
    %892 = vst [vmem:[#allocation2 + $0x8] sm:$0xff] %v828
    %893 = vst [vmem:[#allocation2 + $0x10] sm:$0xff] %v829
    %894 = vst [vmem:[#allocation2 + $0x18] sm:$0xff] %v830
    %895 = vst [vmem:[#allocation2 + $0x20] sm:$0xff] %v831
    %896 = vst [vmem:[#allocation2 + $0x28] sm:$0xff] %v832
    %897 = vst [vmem:[#allocation2 + $0x30] sm:$0xff] %v833
    %898 = vst [vmem:[#allocation2 + $0x38] sm:$0xff] %v834
    %899 = vst [vmem:[#allocation2 + $0x40] sm:$0xff] %v835
    %900 = vst [vmem:[#allocation2 + $0x48] sm:$0xff] %v836
    %901 = vst [vmem:[#allocation2 + $0x50] sm:$0xff] %v837
    %902 = vst [vmem:[#allocation2 + $0x58] sm:$0xff] %v838
    %903 = vst [vmem:[#allocation2 + $0x60] sm:$0xff] %v839
    %904 = vst [vmem:[#allocation2 + $0x68] sm:$0xff] %v840
    %905 = vst [vmem:[#allocation2 + $0x70] sm:$0xff] %v841
    %906 = vst [vmem:[#allocation2 + $0x78] sm:$0xff] %v842
    %907 = vst [vmem:[#allocation2 + $0x80] sm:$0xff] %v843
    %908 = vst [vmem:[#allocation2 + $0x88] sm:$0xff] %v844
    %909 = vst [vmem:[#allocation2 + $0x90] sm:$0xff] %v845
    %910 = vst [vmem:[#allocation2 + $0x98] sm:$0xff] %v846
    %911 = vst [vmem:[#allocation2 + $0xa0] sm:$0xff] %v847
    %912 = vst [vmem:[#allocation2 + $0xa8] sm:$0xff] %v848
    %913 = vst [vmem:[#allocation2 + $0xb0] sm:$0xff] %v849
    %914 = vst [vmem:[#allocation2 + $0xb8] sm:$0xff] %v850
    %915 = vst [vmem:[#allocation2 + $0xc0] sm:$0xff] %v851
    %916 = vst [vmem:[#allocation2 + $0xc8] sm:$0xff] %v852
    %917 = vst [vmem:[#allocation2 + $0xd0] sm:$0xff] %v853
    %918 = vst [vmem:[#allocation2 + $0xd8] sm:$0xff] %v854
    %919 = vst [vmem:[#allocation2 + $0xe0] sm:$0xff] %v855
    %920 = vst [vmem:[#allocation2 + $0xe8] sm:$0xff] %v856
    %921 = vst [vmem:[#allocation2 + $0xf0] sm:$0xff] %v857
    %922 = vst [vmem:[#allocation2 + $0xf8] sm:$0xff] %v858
    %923 = vst [vmem:[#allocation2 + $0x100] sm:$0xff] %v859
    %924 = vst [vmem:[#allocation2 + $0x108] sm:$0xff] %v860
    %925 = vst [vmem:[#allocation2 + $0x110] sm:$0xff] %v861
    %926 = vst [vmem:[#allocation2 + $0x118] sm:$0xff] %v862
    %927 = vst [vmem:[#allocation2 + $0x120] sm:$0xff] %v863
    %928 = vst [vmem:[#allocation2 + $0x128] sm:$0xff] %v864
    %929 = vst [vmem:[#allocation2 + $0x130] sm:$0xff] %v865
    %930 = vst [vmem:[#allocation2 + $0x138] sm:$0xff] %v866
    %931 = vst [vmem:[#allocation2 + $0x140] sm:$0xff] %v867
    %932 = vst [vmem:[#allocation2 + $0x148] sm:$0xff] %v868
    %933 = vst [vmem:[#allocation2 + $0x150] sm:$0xff] %v869
    %934 = vst [vmem:[#allocation2 + $0x158] sm:$0xff] %v870
    %935 = vst [vmem:[#allocation2 + $0x160] sm:$0xff] %v871
    %936 = vst [vmem:[#allocation2 + $0x168] sm:$0xff] %v872
    %937 = vst [vmem:[#allocation2 + $0x170] sm:$0xff] %v873
    %938 = vst [vmem:[#allocation2 + $0x178] sm:$0xff] %v874
    %939 = vst [vmem:[#allocation2 + $0x180] sm:$0xff] %v875
    %940 = vst [vmem:[#allocation2 + $0x188] sm:$0xff] %v876
    %941 = vst [vmem:[#allocation2 + $0x190] sm:$0xff] %v877
    %942 = vst [vmem:[#allocation2 + $0x198] sm:$0xff] %v878
    %943 = vst [vmem:[#allocation2 + $0x1a0] sm:$0xff] %v879
    %944 = vst [vmem:[#allocation2 + $0x1a8] sm:$0xff] %v880
    %945 = vst [vmem:[#allocation2 + $0x1b0] sm:$0xff] %v881
    %946 = vst [vmem:[#allocation2 + $0x1b8] sm:$0xff] %v882
    %947 = vst [vmem:[#allocation2 + $0x1c0] sm:$0xff] %v883
    %948 = vst [vmem:[#allocation2 + $0x1c8] sm:$0xff] %v884
    %949 = vst [vmem:[#allocation2 + $0x1d0] sm:$0xff] %v885
    %950 = vst [vmem:[#allocation2 + $0x1d8] sm:$0xff] %v886
    %951 = vst [vmem:[#allocation2 + $0x1e0] sm:$0xff] %v887
    %952 = vst [vmem:[#allocation2 + $0x1e8] sm:$0xff] %v888
    %953 = vst [vmem:[#allocation2 + $0x1f0] sm:$0xff] %v889
    %954 = vst [vmem:[#allocation2 + $0x1f8] sm:$0xff] %v890
    %s955 = scalar_lea.vmem [#allocation2], 16
    %v956 = vld [vmem:[%s955] sm:$0xff]
    %v957 = vld [vmem:[%s955 + $0x8] sm:$0xff]
    %v958 = vld [vmem:[%s955 + $0x10] sm:$0xff]
    %v959 = vld [vmem:[%s955 + $0x18] sm:$0xff]
    %v960 = vld [vmem:[%s955 + $0x20] sm:$0xff]
    %v961 = vld [vmem:[%s955 + $0x28] sm:$0xff]
    %v962 = vld [vmem:[%s955 + $0x30] sm:$0xff]
    %v963 = vld [vmem:[%s955 + $0x38] sm:$0xff]
    %v964 = vld [vmem:[%s955 + $0x40] sm:$0xff]
    %v965 = vld [vmem:[%s955 + $0x48] sm:$0xff]
    %v966 = vld [vmem:[%s955 + $0x50] sm:$0xff]
    %v967 = vld [vmem:[%s955 + $0x58] sm:$0xff]
    %v968 = vld [vmem:[%s955 + $0x60] sm:$0xff]
    %v969 = vld [vmem:[%s955 + $0x68] sm:$0xff]
    %v970 = vld [vmem:[%s955 + $0x70] sm:$0xff]
    %v971 = vld [vmem:[%s955 + $0x78] sm:$0xff]
    %v972 = vld [vmem:[%s955 + $0x80] sm:$0xff]
    %v973 = vld [vmem:[%s955 + $0x88] sm:$0xff]
    %v974 = vld [vmem:[%s955 + $0x90] sm:$0xff]
    %v975 = vld [vmem:[%s955 + $0x98] sm:$0xff]
    %v976 = vld [vmem:[%s955 + $0xa0] sm:$0xff]
    %v977 = vld [vmem:[%s955 + $0xa8] sm:$0xff]
    %v978 = vld [vmem:[%s955 + $0xb0] sm:$0xff]
    %v979 = vld [vmem:[%s955 + $0xb8] sm:$0xff]
    %v980 = vld [vmem:[%s955 + $0xc0] sm:$0xff]
    %v981 = vld [vmem:[%s955 + $0xc8] sm:$0xff]
    %v982 = vld [vmem:[%s955 + $0xd0] sm:$0xff]
    %v983 = vld [vmem:[%s955 + $0xd8] sm:$0xff]
    %v984 = vld [vmem:[%s955 + $0xe0] sm:$0xff]
    %v985 = vld [vmem:[%s955 + $0xe8] sm:$0xff]
    %v986 = vld [vmem:[%s955 + $0x100] sm:$0xff]
    %v987 = vld [vmem:[%s955 + $0x108] sm:$0xff]
    %v988 = vld [vmem:[%s955 + $0x110] sm:$0xff]
    %v989 = vld [vmem:[%s955 + $0x118] sm:$0xff]
    %v990 = vld [vmem:[%s955 + $0x120] sm:$0xff]
    %v991 = vld [vmem:[%s955 + $0x128] sm:$0xff]
    %v992 = vld [vmem:[%s955 + $0x130] sm:$0xff]
    %v993 = vld [vmem:[%s955 + $0x138] sm:$0xff]
    %v994 = vld [vmem:[%s955 + $0x140] sm:$0xff]
    %v995 = vld [vmem:[%s955 + $0x148] sm:$0xff]
    %v996 = vld [vmem:[%s955 + $0x150] sm:$0xff]
    %v997 = vld [vmem:[%s955 + $0x158] sm:$0xff]
    %v998 = vld [vmem:[%s955 + $0x160] sm:$0xff]
    %v999 = vld [vmem:[%s955 + $0x168] sm:$0xff]
    %v1000 = vld [vmem:[%s955 + $0x170] sm:$0xff]
    %v1001 = vld [vmem:[%s955 + $0x178] sm:$0xff]
    %v1002 = vld [vmem:[%s955 + $0x180] sm:$0xff]
    %v1003 = vld [vmem:[%s955 + $0x188] sm:$0xff]
    %v1004 = vld [vmem:[%s955 + $0x190] sm:$0xff]
    %v1005 = vld [vmem:[%s955 + $0x198] sm:$0xff]
    %v1006 = vld [vmem:[%s955 + $0x1a0] sm:$0xff]
    %v1007 = vld [vmem:[%s955 + $0x1a8] sm:$0xff]
    %v1008 = vld [vmem:[%s955 + $0x1b0] sm:$0xff]
    %v1009 = vld [vmem:[%s955 + $0x1b8] sm:$0xff]
    %v1010 = vld [vmem:[%s955 + $0x1c0] sm:$0xff]
    %v1011 = vld [vmem:[%s955 + $0x1c8] sm:$0xff]
    %v1012 = vld [vmem:[%s955 + $0x1d0] sm:$0xff]
    %v1013 = vld [vmem:[%s955 + $0x1d8] sm:$0xff]
    %v1014 = vld [vmem:[%s955 + $0x1e0] sm:$0xff]
    %v1015 = vld [vmem:[%s955 + $0x1e8] sm:$0xff]
    %v1016 = vlaneseq
    %v1017 = vshrl.u32 %v1016, 7
    %v1018 = vsub.s32 0, %v1017
    %v1019 = vrot.slane %v107, %v1018
    %v1020 = vmul.f32 %v334, %v1019
    %v1021 = vmul.f32 %v176, %v1019
    %v1022 = vmul.f32 %v335, %v1019
    %v1023 = vmul.f32 %v179, %v1019
    %v1024 = vmul.f32 %v336, %v1019
    %v1025 = vmul.f32 %v182, %v1019
    %v1026 = vmul.f32 %v337, %v1019
    %v1027 = vmul.f32 %v185, %v1019
    %v1028 = vmul.f32 %v338, %v1019
    %v1029 = vmul.f32 %v188, %v1019
    %v1030 = vmul.f32 %v339, %v1019
    %v1031 = vmul.f32 %v191, %v1019
    %v1032 = vmul.f32 %v340, %v1019
    %v1033 = vmul.f32 %v194, %v1019
    %v1034 = vmul.f32 %v341, %v1019
    %v1035 = vmul.f32 %v197, %v1019
    %v1036 = vmul.f32 %v342, %v1019
    %v1037 = vmul.f32 %v200, %v1019
    %v1038 = vmul.f32 %v343, %v1019
    %v1039 = vmul.f32 %v203, %v1019
    %v1040 = vmul.f32 %v344, %v1019
    %v1041 = vmul.f32 %v206, %v1019
    %v1042 = vmul.f32 %v345, %v1019
    %v1043 = vmul.f32 %v209, %v1019
    %v1044 = vmul.f32 %v346, %v1019
    %v1045 = vmul.f32 %v212, %v1019
    %v1046 = vmul.f32 %v347, %v1019
    %v1047 = vmul.f32 %v215, %v1019
    %v1048 = vmul.f32 %v348, %v1019
    %v1049 = vmul.f32 %v218, %v1019
    %v1050 = vmul.f32 %v350, %v1019
    %v1051 = vmul.f32 %v224, %v1019
    %v1052 = vmul.f32 %v351, %v1019
    %v1053 = vmul.f32 %v227, %v1019
    %v1054 = vmul.f32 %v352, %v1019
    %v1055 = vmul.f32 %v230, %v1019
    %v1056 = vmul.f32 %v353, %v1019
    %v1057 = vmul.f32 %v233, %v1019
    %v1058 = vmul.f32 %v354, %v1019
    %v1059 = vmul.f32 %v236, %v1019
    %v1060 = vmul.f32 %v355, %v1019
    %v1061 = vmul.f32 %v239, %v1019
    %v1062 = vmul.f32 %v356, %v1019
    %v1063 = vmul.f32 %v242, %v1019
    %v1064 = vmul.f32 %v357, %v1019
    %v1065 = vmul.f32 %v245, %v1019
    %v1066 = vmul.f32 %v358, %v1019
    %v1067 = vmul.f32 %v248, %v1019
    %v1068 = vmul.f32 %v359, %v1019
    %v1069 = vmul.f32 %v251, %v1019
    %v1070 = vmul.f32 %v360, %v1019
    %v1071 = vmul.f32 %v254, %v1019
    %v1072 = vmul.f32 %v361, %v1019
    %v1073 = vmul.f32 %v257, %v1019
    %v1074 = vmul.f32 %v362, %v1019
    %v1075 = vmul.f32 %v260, %v1019
    %v1076 = vmul.f32 %v363, %v1019
    %v1077 = vmul.f32 %v263, %v1019
    %v1078 = vmul.f32 %v364, %v1019
    %v1079 = vmul.f32 %v266, %v1019
    %v1080 = vlaneseq
    %v1081 = vshrl.u32 %v1080, 7
    %v1082 = vsub.s32 1, %v1081
    %v1083 = vrot.slane %v107, %v1082
    %v1084 = vmul.f32 %v43, %v1083
    %v1085 = vmul.f32 %v44, %v1083
    %v1086 = vmul.f32 %v45, %v1083
    %v1087 = vmul.f32 %v46, %v1083
    %v1088 = vmul.f32 %v47, %v1083
    %v1089 = vmul.f32 %v48, %v1083
    %v1090 = vmul.f32 %v49, %v1083
    %v1091 = vmul.f32 %v50, %v1083
    %v1092 = vmul.f32 %v51, %v1083
    %v1093 = vmul.f32 %v52, %v1083
    %v1094 = vmul.f32 %v53, %v1083
    %v1095 = vmul.f32 %v54, %v1083
    %v1096 = vmul.f32 %v55, %v1083
    %v1097 = vmul.f32 %v56, %v1083
    %v1098 = vmul.f32 %v57, %v1083
    %v1099 = vmul.f32 %v58, %v1083
    %v1100 = vmul.f32 %v59, %v1083
    %v1101 = vmul.f32 %v60, %v1083
    %v1102 = vmul.f32 %v61, %v1083
    %v1103 = vmul.f32 %v62, %v1083
    %v1104 = vmul.f32 %v63, %v1083
    %v1105 = vmul.f32 %v64, %v1083
    %v1106 = vmul.f32 %v65, %v1083
    %v1107 = vmul.f32 %v66, %v1083
    %v1108 = vmul.f32 %v67, %v1083
    %v1109 = vmul.f32 %v68, %v1083
    %v1110 = vmul.f32 %v69, %v1083
    %v1111 = vmul.f32 %v70, %v1083
    %v1112 = vmul.f32 %v71, %v1083
    %v1113 = vmul.f32 %v72, %v1083
    %v1114 = vmul.f32 %v75, %v1083
    %v1115 = vmul.f32 %v76, %v1083
    %v1116 = vmul.f32 %v77, %v1083
    %v1117 = vmul.f32 %v78, %v1083
    %v1118 = vmul.f32 %v79, %v1083
    %v1119 = vmul.f32 %v80, %v1083
    %v1120 = vmul.f32 %v81, %v1083
    %v1121 = vmul.f32 %v82, %v1083
    %v1122 = vmul.f32 %v83, %v1083
    %v1123 = vmul.f32 %v84, %v1083
    %v1124 = vmul.f32 %v85, %v1083
    %v1125 = vmul.f32 %v86, %v1083
    %v1126 = vmul.f32 %v87, %v1083
    %v1127 = vmul.f32 %v88, %v1083
    %v1128 = vmul.f32 %v89, %v1083
    %v1129 = vmul.f32 %v90, %v1083
    %v1130 = vmul.f32 %v91, %v1083
    %v1131 = vmul.f32 %v92, %v1083
    %v1132 = vmul.f32 %v93, %v1083
    %v1133 = vmul.f32 %v94, %v1083
    %v1134 = vmul.f32 %v95, %v1083
    %v1135 = vmul.f32 %v96, %v1083
    %v1136 = vmul.f32 %v97, %v1083
    %v1137 = vmul.f32 %v98, %v1083
    %v1138 = vmul.f32 %v99, %v1083
    %v1139 = vmul.f32 %v100, %v1083
    %v1140 = vmul.f32 %v101, %v1083
    %v1141 = vmul.f32 %v102, %v1083
    %v1142 = vmul.f32 %v103, %v1083
    %v1143 = vmul.f32 %v104, %v1083
    %v1144 = vadd.f32 %v1020, %v1084
    %v1145 = vadd.f32 %v1021, %v1085
    %v1146 = vadd.f32 %v1022, %v1086
    %v1147 = vadd.f32 %v1023, %v1087
    %v1148 = vadd.f32 %v1024, %v1088
    %v1149 = vadd.f32 %v1025, %v1089
    %v1150 = vadd.f32 %v1026, %v1090
    %v1151 = vadd.f32 %v1027, %v1091
    %v1152 = vadd.f32 %v1028, %v1092
    %v1153 = vadd.f32 %v1029, %v1093
    %v1154 = vadd.f32 %v1030, %v1094
    %v1155 = vadd.f32 %v1031, %v1095
    %v1156 = vadd.f32 %v1032, %v1096
    %v1157 = vadd.f32 %v1033, %v1097
    %v1158 = vadd.f32 %v1034, %v1098
    %v1159 = vadd.f32 %v1035, %v1099
    %v1160 = vadd.f32 %v1036, %v1100
    %v1161 = vadd.f32 %v1037, %v1101
    %v1162 = vadd.f32 %v1038, %v1102
    %v1163 = vadd.f32 %v1039, %v1103
    %v1164 = vadd.f32 %v1040, %v1104
    %v1165 = vadd.f32 %v1041, %v1105
    %v1166 = vadd.f32 %v1042, %v1106
    %v1167 = vadd.f32 %v1043, %v1107
    %v1168 = vadd.f32 %v1044, %v1108
    %v1169 = vadd.f32 %v1045, %v1109
    %v1170 = vadd.f32 %v1046, %v1110
    %v1171 = vadd.f32 %v1047, %v1111
    %v1172 = vadd.f32 %v1048, %v1112
    %v1173 = vadd.f32 %v1049, %v1113
    %v1174 = vadd.f32 %v1050, %v1114
    %v1175 = vadd.f32 %v1051, %v1115
    %v1176 = vadd.f32 %v1052, %v1116
    %v1177 = vadd.f32 %v1053, %v1117
    %v1178 = vadd.f32 %v1054, %v1118
    %v1179 = vadd.f32 %v1055, %v1119
    %v1180 = vadd.f32 %v1056, %v1120
    %v1181 = vadd.f32 %v1057, %v1121
    %v1182 = vadd.f32 %v1058, %v1122
    %v1183 = vadd.f32 %v1059, %v1123
    %v1184 = vadd.f32 %v1060, %v1124
    %v1185 = vadd.f32 %v1061, %v1125
    %v1186 = vadd.f32 %v1062, %v1126
    %v1187 = vadd.f32 %v1063, %v1127
    %v1188 = vadd.f32 %v1064, %v1128
    %v1189 = vadd.f32 %v1065, %v1129
    %v1190 = vadd.f32 %v1066, %v1130
    %v1191 = vadd.f32 %v1067, %v1131
    %v1192 = vadd.f32 %v1068, %v1132
    %v1193 = vadd.f32 %v1069, %v1133
    %v1194 = vadd.f32 %v1070, %v1134
    %v1195 = vadd.f32 %v1071, %v1135
    %v1196 = vadd.f32 %v1072, %v1136
    %v1197 = vadd.f32 %v1073, %v1137
    %v1198 = vadd.f32 %v1074, %v1138
    %v1199 = vadd.f32 %v1075, %v1139
    %v1200 = vadd.f32 %v1076, %v1140
    %v1201 = vadd.f32 %v1077, %v1141
    %v1202 = vadd.f32 %v1078, %v1142
    %v1203 = vadd.f32 %v1079, %v1143
    %v1204 = vlaneseq
    %v1205 = vshrl.u32 %v1204, 7
    %v1206 = vsub.s32 2, %v1205
    %v1207 = vrot.slane %v107, %v1206
    %v1208 = vmul.f32 %v369, %v1207
    %v1209 = vmul.f32 %v527, %v1207
    %v1210 = vmul.f32 %v372, %v1207
    %v1211 = vmul.f32 %v528, %v1207
    %v1212 = vmul.f32 %v375, %v1207
    %v1213 = vmul.f32 %v529, %v1207
    %v1214 = vmul.f32 %v378, %v1207
    %v1215 = vmul.f32 %v530, %v1207
    %v1216 = vmul.f32 %v381, %v1207
    %v1217 = vmul.f32 %v531, %v1207
    %v1218 = vmul.f32 %v384, %v1207
    %v1219 = vmul.f32 %v532, %v1207
    %v1220 = vmul.f32 %v387, %v1207
    %v1221 = vmul.f32 %v533, %v1207
    %v1222 = vmul.f32 %v390, %v1207
    %v1223 = vmul.f32 %v534, %v1207
    %v1224 = vmul.f32 %v393, %v1207
    %v1225 = vmul.f32 %v535, %v1207
    %v1226 = vmul.f32 %v396, %v1207
    %v1227 = vmul.f32 %v536, %v1207
    %v1228 = vmul.f32 %v399, %v1207
    %v1229 = vmul.f32 %v537, %v1207
    %v1230 = vmul.f32 %v402, %v1207
    %v1231 = vmul.f32 %v538, %v1207
    %v1232 = vmul.f32 %v405, %v1207
    %v1233 = vmul.f32 %v539, %v1207
    %v1234 = vmul.f32 %v408, %v1207
    %v1235 = vmul.f32 %v540, %v1207
    %v1236 = vmul.f32 %v411, %v1207
    %v1237 = vmul.f32 %v541, %v1207
    %v1238 = vmul.f32 %v417, %v1207
    %v1239 = vmul.f32 %v543, %v1207
    %v1240 = vmul.f32 %v420, %v1207
    %v1241 = vmul.f32 %v544, %v1207
    %v1242 = vmul.f32 %v423, %v1207
    %v1243 = vmul.f32 %v545, %v1207
    %v1244 = vmul.f32 %v426, %v1207
    %v1245 = vmul.f32 %v546, %v1207
    %v1246 = vmul.f32 %v429, %v1207
    %v1247 = vmul.f32 %v547, %v1207
    %v1248 = vmul.f32 %v432, %v1207
    %v1249 = vmul.f32 %v548, %v1207
    %v1250 = vmul.f32 %v435, %v1207
    %v1251 = vmul.f32 %v549, %v1207
    %v1252 = vmul.f32 %v438, %v1207
    %v1253 = vmul.f32 %v550, %v1207
    %v1254 = vmul.f32 %v441, %v1207
    %v1255 = vmul.f32 %v551, %v1207
    %v1256 = vmul.f32 %v444, %v1207
    %v1257 = vmul.f32 %v552, %v1207
    %v1258 = vmul.f32 %v447, %v1207
    %v1259 = vmul.f32 %v553, %v1207
    %v1260 = vmul.f32 %v450, %v1207
    %v1261 = vmul.f32 %v554, %v1207
    %v1262 = vmul.f32 %v453, %v1207
    %v1263 = vmul.f32 %v555, %v1207
    %v1264 = vmul.f32 %v456, %v1207
    %v1265 = vmul.f32 %v556, %v1207
    %v1266 = vmul.f32 %v459, %v1207
    %v1267 = vmul.f32 %v557, %v1207
    %v1268 = vadd.f32 %v1144, %v1208
    %v1269 = vadd.f32 %v1145, %v1209
    %v1270 = vadd.f32 %v1146, %v1210
    %v1271 = vadd.f32 %v1147, %v1211
    %v1272 = vadd.f32 %v1148, %v1212
    %v1273 = vadd.f32 %v1149, %v1213
    %v1274 = vadd.f32 %v1150, %v1214
    %v1275 = vadd.f32 %v1151, %v1215
    %v1276 = vadd.f32 %v1152, %v1216
    %v1277 = vadd.f32 %v1153, %v1217
    %v1278 = vadd.f32 %v1154, %v1218
    %v1279 = vadd.f32 %v1155, %v1219
    %v1280 = vadd.f32 %v1156, %v1220
    %v1281 = vadd.f32 %v1157, %v1221
    %v1282 = vadd.f32 %v1158, %v1222
    %v1283 = vadd.f32 %v1159, %v1223
    %v1284 = vadd.f32 %v1160, %v1224
    %v1285 = vadd.f32 %v1161, %v1225
    %v1286 = vadd.f32 %v1162, %v1226
    %v1287 = vadd.f32 %v1163, %v1227
    %v1288 = vadd.f32 %v1164, %v1228
    %v1289 = vadd.f32 %v1165, %v1229
    %v1290 = vadd.f32 %v1166, %v1230
    %v1291 = vadd.f32 %v1167, %v1231
    %v1292 = vadd.f32 %v1168, %v1232
    %v1293 = vadd.f32 %v1169, %v1233
    %v1294 = vadd.f32 %v1170, %v1234
    %v1295 = vadd.f32 %v1171, %v1235
    %v1296 = vadd.f32 %v1172, %v1236
    %v1297 = vadd.f32 %v1173, %v1237
    %v1298 = vadd.f32 %v1174, %v1238
    %v1299 = vadd.f32 %v1175, %v1239
    %v1300 = vadd.f32 %v1176, %v1240
    %v1301 = vadd.f32 %v1177, %v1241
    %v1302 = vadd.f32 %v1178, %v1242
    %v1303 = vadd.f32 %v1179, %v1243
    %v1304 = vadd.f32 %v1180, %v1244
    %v1305 = vadd.f32 %v1181, %v1245
    %v1306 = vadd.f32 %v1182, %v1246
    %v1307 = vadd.f32 %v1183, %v1247
    %v1308 = vadd.f32 %v1184, %v1248
    %v1309 = vadd.f32 %v1185, %v1249
    %v1310 = vadd.f32 %v1186, %v1250
    %v1311 = vadd.f32 %v1187, %v1251
    %v1312 = vadd.f32 %v1188, %v1252
    %v1313 = vadd.f32 %v1189, %v1253
    %v1314 = vadd.f32 %v1190, %v1254
    %v1315 = vadd.f32 %v1191, %v1255
    %v1316 = vadd.f32 %v1192, %v1256
    %v1317 = vadd.f32 %v1193, %v1257
    %v1318 = vadd.f32 %v1194, %v1258
    %v1319 = vadd.f32 %v1195, %v1259
    %v1320 = vadd.f32 %v1196, %v1260
    %v1321 = vadd.f32 %v1197, %v1261
    %v1322 = vadd.f32 %v1198, %v1262
    %v1323 = vadd.f32 %v1199, %v1263
    %v1324 = vadd.f32 %v1200, %v1264
    %v1325 = vadd.f32 %v1201, %v1265
    %v1326 = vadd.f32 %v1202, %v1266
    %v1327 = vadd.f32 %v1203, %v1267
    %v1328 = vadd.f32 %v956, %v1268
    %v1329 = vadd.f32 %v957, %v1269
    %v1330 = vadd.f32 %v958, %v1270
    %v1331 = vadd.f32 %v959, %v1271
    %v1332 = vadd.f32 %v960, %v1272
    %v1333 = vadd.f32 %v961, %v1273
    %v1334 = vadd.f32 %v962, %v1274
    %v1335 = vadd.f32 %v963, %v1275
    %v1336 = vadd.f32 %v964, %v1276
    %v1337 = vadd.f32 %v965, %v1277
    %v1338 = vadd.f32 %v966, %v1278
    %v1339 = vadd.f32 %v967, %v1279
    %v1340 = vadd.f32 %v968, %v1280
    %v1341 = vadd.f32 %v969, %v1281
    %v1342 = vadd.f32 %v970, %v1282
    %v1343 = vadd.f32 %v971, %v1283
    %v1344 = vadd.f32 %v972, %v1284
    %v1345 = vadd.f32 %v973, %v1285
    %v1346 = vadd.f32 %v974, %v1286
    %v1347 = vadd.f32 %v975, %v1287
    %v1348 = vadd.f32 %v976, %v1288
    %v1349 = vadd.f32 %v977, %v1289
    %v1350 = vadd.f32 %v978, %v1290
    %v1351 = vadd.f32 %v979, %v1291
    %v1352 = vadd.f32 %v980, %v1292
    %v1353 = vadd.f32 %v981, %v1293
    %v1354 = vadd.f32 %v982, %v1294
    %v1355 = vadd.f32 %v983, %v1295
    %v1356 = vadd.f32 %v984, %v1296
    %v1357 = vadd.f32 %v985, %v1297
    %v1358 = vadd.f32 %v986, %v1298
    %v1359 = vadd.f32 %v987, %v1299
    %v1360 = vadd.f32 %v988, %v1300
    %v1361 = vadd.f32 %v989, %v1301
    %v1362 = vadd.f32 %v990, %v1302
    %v1363 = vadd.f32 %v991, %v1303
    %v1364 = vadd.f32 %v992, %v1304
    %v1365 = vadd.f32 %v993, %v1305
    %v1366 = vadd.f32 %v994, %v1306
    %v1367 = vadd.f32 %v995, %v1307
    %v1368 = vadd.f32 %v996, %v1308
    %v1369 = vadd.f32 %v997, %v1309
    %v1370 = vadd.f32 %v998, %v1310
    %v1371 = vadd.f32 %v999, %v1311
    %v1372 = vadd.f32 %v1000, %v1312
    %v1373 = vadd.f32 %v1001, %v1313
    %v1374 = vadd.f32 %v1002, %v1314
    %v1375 = vadd.f32 %v1003, %v1315
    %v1376 = vadd.f32 %v1004, %v1316
    %v1377 = vadd.f32 %v1005, %v1317
    %v1378 = vadd.f32 %v1006, %v1318
    %v1379 = vadd.f32 %v1007, %v1319
    %v1380 = vadd.f32 %v1008, %v1320
    %v1381 = vadd.f32 %v1009, %v1321
    %v1382 = vadd.f32 %v1010, %v1322
    %v1383 = vadd.f32 %v1011, %v1323
    %v1384 = vadd.f32 %v1012, %v1324
    %v1385 = vadd.f32 %v1013, %v1325
    %v1386 = vadd.f32 %v1014, %v1326
    %v1387 = vadd.f32 %v1015, %v1327
    %1388 = vst [vmem:[%s955] sm:$0xff] %v1328
    %1389 = vst [vmem:[%s955 + $0x8] sm:$0xff] %v1329
    %1390 = vst [vmem:[%s955 + $0x10] sm:$0xff] %v1330
    %1391 = vst [vmem:[%s955 + $0x18] sm:$0xff] %v1331
    %1392 = vst [vmem:[%s955 + $0x20] sm:$0xff] %v1332
    %1393 = vst [vmem:[%s955 + $0x28] sm:$0xff] %v1333
    %1394 = vst [vmem:[%s955 + $0x30] sm:$0xff] %v1334
    %1395 = vst [vmem:[%s955 + $0x38] sm:$0xff] %v1335
    %1396 = vst [vmem:[%s955 + $0x40] sm:$0xff] %v1336
    %1397 = vst [vmem:[%s955 + $0x48] sm:$0xff] %v1337
    %1398 = vst [vmem:[%s955 + $0x50] sm:$0xff] %v1338
    %1399 = vst [vmem:[%s955 + $0x58] sm:$0xff] %v1339
    %1400 = vst [vmem:[%s955 + $0x60] sm:$0xff] %v1340
    %1401 = vst [vmem:[%s955 + $0x68] sm:$0xff] %v1341
    %1402 = vst [vmem:[%s955 + $0x70] sm:$0xff] %v1342
    %1403 = vst [vmem:[%s955 + $0x78] sm:$0xff] %v1343
    %1404 = vst [vmem:[%s955 + $0x80] sm:$0xff] %v1344
    %1405 = vst [vmem:[%s955 + $0x88] sm:$0xff] %v1345
    %1406 = vst [vmem:[%s955 + $0x90] sm:$0xff] %v1346
    %1407 = vst [vmem:[%s955 + $0x98] sm:$0xff] %v1347
    %1408 = vst [vmem:[%s955 + $0xa0] sm:$0xff] %v1348
    %1409 = vst [vmem:[%s955 + $0xa8] sm:$0xff] %v1349
    %1410 = vst [vmem:[%s955 + $0xb0] sm:$0xff] %v1350
    %1411 = vst [vmem:[%s955 + $0xb8] sm:$0xff] %v1351
    %1412 = vst [vmem:[%s955 + $0xc0] sm:$0xff] %v1352
    %1413 = vst [vmem:[%s955 + $0xc8] sm:$0xff] %v1353
    %1414 = vst [vmem:[%s955 + $0xd0] sm:$0xff] %v1354
    %1415 = vst [vmem:[%s955 + $0xd8] sm:$0xff] %v1355
    %1416 = vst [vmem:[%s955 + $0xe0] sm:$0xff] %v1356
    %1417 = vst [vmem:[%s955 + $0xe8] sm:$0xff] %v1357
    %1418 = vst [vmem:[%s955 + $0x100] sm:$0xff] %v1358
    %1419 = vst [vmem:[%s955 + $0x108] sm:$0xff] %v1359
    %1420 = vst [vmem:[%s955 + $0x110] sm:$0xff] %v1360
    %1421 = vst [vmem:[%s955 + $0x118] sm:$0xff] %v1361
    %1422 = vst [vmem:[%s955 + $0x120] sm:$0xff] %v1362
    %1423 = vst [vmem:[%s955 + $0x128] sm:$0xff] %v1363
    %1424 = vst [vmem:[%s955 + $0x130] sm:$0xff] %v1364
    %1425 = vst [vmem:[%s955 + $0x138] sm:$0xff] %v1365
    %1426 = vst [vmem:[%s955 + $0x140] sm:$0xff] %v1366
    %1427 = vst [vmem:[%s955 + $0x148] sm:$0xff] %v1367
    %1428 = vst [vmem:[%s955 + $0x150] sm:$0xff] %v1368
    %1429 = vst [vmem:[%s955 + $0x158] sm:$0xff] %v1369
    %1430 = vst [vmem:[%s955 + $0x160] sm:$0xff] %v1370
    %1431 = vst [vmem:[%s955 + $0x168] sm:$0xff] %v1371
    %1432 = vst [vmem:[%s955 + $0x170] sm:$0xff] %v1372
    %1433 = vst [vmem:[%s955 + $0x178] sm:$0xff] %v1373
    %1434 = vst [vmem:[%s955 + $0x180] sm:$0xff] %v1374
    %1435 = vst [vmem:[%s955 + $0x188] sm:$0xff] %v1375
    %1436 = vst [vmem:[%s955 + $0x190] sm:$0xff] %v1376
    %1437 = vst [vmem:[%s955 + $0x198] sm:$0xff] %v1377
    %1438 = vst [vmem:[%s955 + $0x1a0] sm:$0xff] %v1378
    %1439 = vst [vmem:[%s955 + $0x1a8] sm:$0xff] %v1379
    %1440 = vst [vmem:[%s955 + $0x1b0] sm:$0xff] %v1380
    %1441 = vst [vmem:[%s955 + $0x1b8] sm:$0xff] %v1381
    %1442 = vst [vmem:[%s955 + $0x1c0] sm:$0xff] %v1382
    %1443 = vst [vmem:[%s955 + $0x1c8] sm:$0xff] %v1383
    %1444 = vst [vmem:[%s955 + $0x1d0] sm:$0xff] %v1384
    %1445 = vst [vmem:[%s955 + $0x1d8] sm:$0xff] %v1385
    %1446 = vst [vmem:[%s955 + $0x1e0] sm:$0xff] %v1386
    %1447 = vst [vmem:[%s955 + $0x1e8] sm:$0xff] %v1387
    %v1448 = vld [vmem:[#allocation2] sm:$0xff]
    %v1449 = vld [vmem:[#allocation2 + $0x8] sm:$0xff]
    %v1450 = vld [vmem:[#allocation2 + $0x10] sm:$0xff]
    %v1451 = vld [vmem:[#allocation2 + $0x18] sm:$0xff]
    %v1452 = vld [vmem:[#allocation2 + $0x20] sm:$0xff]
    %v1453 = vld [vmem:[#allocation2 + $0x28] sm:$0xff]
    %v1454 = vld [vmem:[#allocation2 + $0x30] sm:$0xff]
    %v1455 = vld [vmem:[#allocation2 + $0x38] sm:$0xff]
    %v1456 = vld [vmem:[#allocation2 + $0x40] sm:$0xff]
    %v1457 = vld [vmem:[#allocation2 + $0x48] sm:$0xff]
    %v1458 = vld [vmem:[#allocation2 + $0x50] sm:$0xff]
    %v1459 = vld [vmem:[#allocation2 + $0x58] sm:$0xff]
    %v1460 = vld [vmem:[#allocation2 + $0x60] sm:$0xff]
    %v1461 = vld [vmem:[#allocation2 + $0x68] sm:$0xff]
    %v1462 = vld [vmem:[#allocation2 + $0x70] sm:$0xff]
    %v1463 = vld [vmem:[#allocation2 + $0x78] sm:$0xff]
    %v1464 = vld [vmem:[#allocation2 + $0x80] sm:$0xff]
    %v1465 = vld [vmem:[#allocation2 + $0x88] sm:$0xff]
    %v1466 = vld [vmem:[#allocation2 + $0x90] sm:$0xff]
    %v1467 = vld [vmem:[#allocation2 + $0x98] sm:$0xff]
    %v1468 = vld [vmem:[#allocation2 + $0xa0] sm:$0xff]
    %v1469 = vld [vmem:[#allocation2 + $0xa8] sm:$0xff]
    %v1470 = vld [vmem:[#allocation2 + $0xb0] sm:$0xff]
    %v1471 = vld [vmem:[#allocation2 + $0xb8] sm:$0xff]
    %v1472 = vld [vmem:[#allocation2 + $0xc0] sm:$0xff]
    %v1473 = vld [vmem:[#allocation2 + $0xc8] sm:$0xff]
    %v1474 = vld [vmem:[#allocation2 + $0xd0] sm:$0xff]
    %v1475 = vld [vmem:[#allocation2 + $0xd8] sm:$0xff]
    %v1476 = vld [vmem:[#allocation2 + $0xe0] sm:$0xff]
    %v1477 = vld [vmem:[#allocation2 + $0xe8] sm:$0xff]
    %v1478 = vld [vmem:[#allocation2 + $0x100] sm:$0xff]
    %v1479 = vld [vmem:[#allocation2 + $0x108] sm:$0xff]
    %v1480 = vld [vmem:[#allocation2 + $0x110] sm:$0xff]
    %v1481 = vld [vmem:[#allocation2 + $0x118] sm:$0xff]
    %v1482 = vld [vmem:[#allocation2 + $0x120] sm:$0xff]
    %v1483 = vld [vmem:[#allocation2 + $0x128] sm:$0xff]
    %v1484 = vld [vmem:[#allocation2 + $0x130] sm:$0xff]
    %v1485 = vld [vmem:[#allocation2 + $0x138] sm:$0xff]
    %v1486 = vld [vmem:[#allocation2 + $0x140] sm:$0xff]
    %v1487 = vld [vmem:[#allocation2 + $0x148] sm:$0xff]
    %v1488 = vld [vmem:[#allocation2 + $0x150] sm:$0xff]
    %v1489 = vld [vmem:[#allocation2 + $0x158] sm:$0xff]
    %v1490 = vld [vmem:[#allocation2 + $0x160] sm:$0xff]
    %v1491 = vld [vmem:[#allocation2 + $0x168] sm:$0xff]
    %v1492 = vld [vmem:[#allocation2 + $0x170] sm:$0xff]
    %v1493 = vld [vmem:[#allocation2 + $0x178] sm:$0xff]
    %v1494 = vld [vmem:[#allocation2 + $0x180] sm:$0xff]
    %v1495 = vld [vmem:[#allocation2 + $0x188] sm:$0xff]
    %v1496 = vld [vmem:[#allocation2 + $0x190] sm:$0xff]
    %v1497 = vld [vmem:[#allocation2 + $0x198] sm:$0xff]
    %v1498 = vld [vmem:[#allocation2 + $0x1a0] sm:$0xff]
    %v1499 = vld [vmem:[#allocation2 + $0x1a8] sm:$0xff]
    %v1500 = vld [vmem:[#allocation2 + $0x1b0] sm:$0xff]
    %v1501 = vld [vmem:[#allocation2 + $0x1b8] sm:$0xff]
    %v1502 = vld [vmem:[#allocation2 + $0x1c0] sm:$0xff]
    %v1503 = vld [vmem:[#allocation2 + $0x1c8] sm:$0xff]
    %v1504 = vld [vmem:[#allocation2 + $0x1d0] sm:$0xff]
    %v1505 = vld [vmem:[#allocation2 + $0x1d8] sm:$0xff]
    %v1506 = vld [vmem:[#allocation2 + $0x1e0] sm:$0xff]
    %v1507 = vld [vmem:[#allocation2 + $0x1e8] sm:$0xff]
    %v1508 = vlaneseq
    %v1509 = vshrl.u32 %v1508, 7
    %v1510 = vsub.s32 6, %v1509
    %v1511 = vrot.slane %v107, %v1510
    %v1512 = vmul.f32 %v335, %v1511
    %v1513 = vmul.f32 %v179, %v1511
    %v1514 = vmul.f32 %v336, %v1511
    %v1515 = vmul.f32 %v182, %v1511
    %v1516 = vmul.f32 %v337, %v1511
    %v1517 = vmul.f32 %v185, %v1511
    %v1518 = vmul.f32 %v338, %v1511
    %v1519 = vmul.f32 %v188, %v1511
    %v1520 = vmul.f32 %v339, %v1511
    %v1521 = vmul.f32 %v191, %v1511
    %v1522 = vmul.f32 %v340, %v1511
    %v1523 = vmul.f32 %v194, %v1511
    %v1524 = vmul.f32 %v341, %v1511
    %v1525 = vmul.f32 %v197, %v1511
    %v1526 = vmul.f32 %v342, %v1511
    %v1527 = vmul.f32 %v200, %v1511
    %v1528 = vmul.f32 %v343, %v1511
    %v1529 = vmul.f32 %v203, %v1511
    %v1530 = vmul.f32 %v344, %v1511
    %v1531 = vmul.f32 %v206, %v1511
    %v1532 = vmul.f32 %v345, %v1511
    %v1533 = vmul.f32 %v209, %v1511
    %v1534 = vmul.f32 %v346, %v1511
    %v1535 = vmul.f32 %v212, %v1511
    %v1536 = vmul.f32 %v347, %v1511
    %v1537 = vmul.f32 %v215, %v1511
    %v1538 = vmul.f32 %v348, %v1511
    %v1539 = vmul.f32 %v218, %v1511
    %v1540 = vmul.f32 %v349, %v1511
    %v1541 = vmul.f32 %v221, %v1511
    %v1542 = vmul.f32 %v351, %v1511
    %v1543 = vmul.f32 %v227, %v1511
    %v1544 = vmul.f32 %v352, %v1511
    %v1545 = vmul.f32 %v230, %v1511
    %v1546 = vmul.f32 %v353, %v1511
    %v1547 = vmul.f32 %v233, %v1511
    %v1548 = vmul.f32 %v354, %v1511
    %v1549 = vmul.f32 %v236, %v1511
    %v1550 = vmul.f32 %v355, %v1511
    %v1551 = vmul.f32 %v239, %v1511
    %v1552 = vmul.f32 %v356, %v1511
    %v1553 = vmul.f32 %v242, %v1511
    %v1554 = vmul.f32 %v357, %v1511
    %v1555 = vmul.f32 %v245, %v1511
    %v1556 = vmul.f32 %v358, %v1511
    %v1557 = vmul.f32 %v248, %v1511
    %v1558 = vmul.f32 %v359, %v1511
    %v1559 = vmul.f32 %v251, %v1511
    %v1560 = vmul.f32 %v360, %v1511
    %v1561 = vmul.f32 %v254, %v1511
    %v1562 = vmul.f32 %v361, %v1511
    %v1563 = vmul.f32 %v257, %v1511
    %v1564 = vmul.f32 %v362, %v1511
    %v1565 = vmul.f32 %v260, %v1511
    %v1566 = vmul.f32 %v363, %v1511
    %v1567 = vmul.f32 %v263, %v1511
    %v1568 = vmul.f32 %v364, %v1511
    %v1569 = vmul.f32 %v266, %v1511
    %v1570 = vmul.f32 %v365, %v1511
    %v1571 = vmul.f32 %v269, %v1511
    %v1572 = vlaneseq
    %v1573 = vshrl.u32 %v1572, 7
    %v1574 = vsub.s32 7, %v1573
    %v1575 = vrot.slane %v107, %v1574
    %v1576 = vmul.f32 %v45, %v1575
    %v1577 = vmul.f32 %v46, %v1575
    %v1578 = vmul.f32 %v47, %v1575
    %v1579 = vmul.f32 %v48, %v1575
    %v1580 = vmul.f32 %v49, %v1575
    %v1581 = vmul.f32 %v50, %v1575
    %v1582 = vmul.f32 %v51, %v1575
    %v1583 = vmul.f32 %v52, %v1575
    %v1584 = vmul.f32 %v53, %v1575
    %v1585 = vmul.f32 %v54, %v1575
    %v1586 = vmul.f32 %v55, %v1575
    %v1587 = vmul.f32 %v56, %v1575
    %v1588 = vmul.f32 %v57, %v1575
    %v1589 = vmul.f32 %v58, %v1575
    %v1590 = vmul.f32 %v59, %v1575
    %v1591 = vmul.f32 %v60, %v1575
    %v1592 = vmul.f32 %v61, %v1575
    %v1593 = vmul.f32 %v62, %v1575
    %v1594 = vmul.f32 %v63, %v1575
    %v1595 = vmul.f32 %v64, %v1575
    %v1596 = vmul.f32 %v65, %v1575
    %v1597 = vmul.f32 %v66, %v1575
    %v1598 = vmul.f32 %v67, %v1575
    %v1599 = vmul.f32 %v68, %v1575
    %v1600 = vmul.f32 %v69, %v1575
    %v1601 = vmul.f32 %v70, %v1575
    %v1602 = vmul.f32 %v71, %v1575
    %v1603 = vmul.f32 %v72, %v1575
    %v1604 = vmul.f32 %v73, %v1575
    %v1605 = vmul.f32 %v74, %v1575
    %v1606 = vmul.f32 %v77, %v1575
    %v1607 = vmul.f32 %v78, %v1575
    %v1608 = vmul.f32 %v79, %v1575
    %v1609 = vmul.f32 %v80, %v1575
    %v1610 = vmul.f32 %v81, %v1575
    %v1611 = vmul.f32 %v82, %v1575
    %v1612 = vmul.f32 %v83, %v1575
    %v1613 = vmul.f32 %v84, %v1575
    %v1614 = vmul.f32 %v85, %v1575
    %v1615 = vmul.f32 %v86, %v1575
    %v1616 = vmul.f32 %v87, %v1575
    %v1617 = vmul.f32 %v88, %v1575
    %v1618 = vmul.f32 %v89, %v1575
    %v1619 = vmul.f32 %v90, %v1575
    %v1620 = vmul.f32 %v91, %v1575
    %v1621 = vmul.f32 %v92, %v1575
    %v1622 = vmul.f32 %v93, %v1575
    %v1623 = vmul.f32 %v94, %v1575
    %v1624 = vmul.f32 %v95, %v1575
    %v1625 = vmul.f32 %v96, %v1575
    %v1626 = vmul.f32 %v97, %v1575
    %v1627 = vmul.f32 %v98, %v1575
    %v1628 = vmul.f32 %v99, %v1575
    %v1629 = vmul.f32 %v100, %v1575
    %v1630 = vmul.f32 %v101, %v1575
    %v1631 = vmul.f32 %v102, %v1575
    %v1632 = vmul.f32 %v103, %v1575
    %v1633 = vmul.f32 %v104, %v1575
    %v1634 = vmul.f32 %v105, %v1575
    %v1635 = vmul.f32 %v106, %v1575
    %v1636 = vadd.f32 %v1512, %v1576
    %v1637 = vadd.f32 %v1513, %v1577
    %v1638 = vadd.f32 %v1514, %v1578
    %v1639 = vadd.f32 %v1515, %v1579
    %v1640 = vadd.f32 %v1516, %v1580
    %v1641 = vadd.f32 %v1517, %v1581
    %v1642 = vadd.f32 %v1518, %v1582
    %v1643 = vadd.f32 %v1519, %v1583
    %v1644 = vadd.f32 %v1520, %v1584
    %v1645 = vadd.f32 %v1521, %v1585
    %v1646 = vadd.f32 %v1522, %v1586
    %v1647 = vadd.f32 %v1523, %v1587
    %v1648 = vadd.f32 %v1524, %v1588
    %v1649 = vadd.f32 %v1525, %v1589
    %v1650 = vadd.f32 %v1526, %v1590
    %v1651 = vadd.f32 %v1527, %v1591
    %v1652 = vadd.f32 %v1528, %v1592
    %v1653 = vadd.f32 %v1529, %v1593
    %v1654 = vadd.f32 %v1530, %v1594
    %v1655 = vadd.f32 %v1531, %v1595
    %v1656 = vadd.f32 %v1532, %v1596
    %v1657 = vadd.f32 %v1533, %v1597
    %v1658 = vadd.f32 %v1534, %v1598
    %v1659 = vadd.f32 %v1535, %v1599
    %v1660 = vadd.f32 %v1536, %v1600
    %v1661 = vadd.f32 %v1537, %v1601
    %v1662 = vadd.f32 %v1538, %v1602
    %v1663 = vadd.f32 %v1539, %v1603
    %v1664 = vadd.f32 %v1540, %v1604
    %v1665 = vadd.f32 %v1541, %v1605
    %v1666 = vadd.f32 %v1542, %v1606
    %v1667 = vadd.f32 %v1543, %v1607
    %v1668 = vadd.f32 %v1544, %v1608
    %v1669 = vadd.f32 %v1545, %v1609
    %v1670 = vadd.f32 %v1546, %v1610
    %v1671 = vadd.f32 %v1547, %v1611
    %v1672 = vadd.f32 %v1548, %v1612
    %v1673 = vadd.f32 %v1549, %v1613
    %v1674 = vadd.f32 %v1550, %v1614
    %v1675 = vadd.f32 %v1551, %v1615
    %v1676 = vadd.f32 %v1552, %v1616
    %v1677 = vadd.f32 %v1553, %v1617
    %v1678 = vadd.f32 %v1554, %v1618
    %v1679 = vadd.f32 %v1555, %v1619
    %v1680 = vadd.f32 %v1556, %v1620
    %v1681 = vadd.f32 %v1557, %v1621
    %v1682 = vadd.f32 %v1558, %v1622
    %v1683 = vadd.f32 %v1559, %v1623
    %v1684 = vadd.f32 %v1560, %v1624
    %v1685 = vadd.f32 %v1561, %v1625
    %v1686 = vadd.f32 %v1562, %v1626
    %v1687 = vadd.f32 %v1563, %v1627
    %v1688 = vadd.f32 %v1564, %v1628
    %v1689 = vadd.f32 %v1565, %v1629
    %v1690 = vadd.f32 %v1566, %v1630
    %v1691 = vadd.f32 %v1567, %v1631
    %v1692 = vadd.f32 %v1568, %v1632
    %v1693 = vadd.f32 %v1569, %v1633
    %v1694 = vadd.f32 %v1570, %v1634
    %v1695 = vadd.f32 %v1571, %v1635
    %v1696 = vlaneseq
    %v1697 = vshrl.u32 %v1696, 7
    %v1698 = vsub.s32 0, %v1697
    %v1699 = vrot.slane %v108, %v1698
    %v1700 = vmul.f32 %v372, %v1699
    %v1701 = vmul.f32 %v528, %v1699
    %v1702 = vmul.f32 %v375, %v1699
    %v1703 = vmul.f32 %v529, %v1699
    %v1704 = vmul.f32 %v378, %v1699
    %v1705 = vmul.f32 %v530, %v1699
    %v1706 = vmul.f32 %v381, %v1699
    %v1707 = vmul.f32 %v531, %v1699
    %v1708 = vmul.f32 %v384, %v1699
    %v1709 = vmul.f32 %v532, %v1699
    %v1710 = vmul.f32 %v387, %v1699
    %v1711 = vmul.f32 %v533, %v1699
    %v1712 = vmul.f32 %v390, %v1699
    %v1713 = vmul.f32 %v534, %v1699
    %v1714 = vmul.f32 %v393, %v1699
    %v1715 = vmul.f32 %v535, %v1699
    %v1716 = vmul.f32 %v396, %v1699
    %v1717 = vmul.f32 %v536, %v1699
    %v1718 = vmul.f32 %v399, %v1699
    %v1719 = vmul.f32 %v537, %v1699
    %v1720 = vmul.f32 %v402, %v1699
    %v1721 = vmul.f32 %v538, %v1699
    %v1722 = vmul.f32 %v405, %v1699
    %v1723 = vmul.f32 %v539, %v1699
    %v1724 = vmul.f32 %v408, %v1699
    %v1725 = vmul.f32 %v540, %v1699
    %v1726 = vmul.f32 %v411, %v1699
    %v1727 = vmul.f32 %v541, %v1699
    %v1728 = vmul.f32 %v414, %v1699
    %v1729 = vmul.f32 %v542, %v1699
    %v1730 = vmul.f32 %v420, %v1699
    %v1731 = vmul.f32 %v544, %v1699
    %v1732 = vmul.f32 %v423, %v1699
    %v1733 = vmul.f32 %v545, %v1699
    %v1734 = vmul.f32 %v426, %v1699
    %v1735 = vmul.f32 %v546, %v1699
    %v1736 = vmul.f32 %v429, %v1699
    %v1737 = vmul.f32 %v547, %v1699
    %v1738 = vmul.f32 %v432, %v1699
    %v1739 = vmul.f32 %v548, %v1699
    %v1740 = vmul.f32 %v435, %v1699
    %v1741 = vmul.f32 %v549, %v1699
    %v1742 = vmul.f32 %v438, %v1699
    %v1743 = vmul.f32 %v550, %v1699
    %v1744 = vmul.f32 %v441, %v1699
    %v1745 = vmul.f32 %v551, %v1699
    %v1746 = vmul.f32 %v444, %v1699
    %v1747 = vmul.f32 %v552, %v1699
    %v1748 = vmul.f32 %v447, %v1699
    %v1749 = vmul.f32 %v553, %v1699
    %v1750 = vmul.f32 %v450, %v1699
    %v1751 = vmul.f32 %v554, %v1699
    %v1752 = vmul.f32 %v453, %v1699
    %v1753 = vmul.f32 %v555, %v1699
    %v1754 = vmul.f32 %v456, %v1699
    %v1755 = vmul.f32 %v556, %v1699
    %v1756 = vmul.f32 %v459, %v1699
    %v1757 = vmul.f32 %v557, %v1699
    %v1758 = vmul.f32 %v462, %v1699
    %v1759 = vmul.f32 %v558, %v1699
    %v1760 = vadd.f32 %v1636, %v1700
    %v1761 = vadd.f32 %v1637, %v1701
    %v1762 = vadd.f32 %v1638, %v1702
    %v1763 = vadd.f32 %v1639, %v1703
    %v1764 = vadd.f32 %v1640, %v1704
    %v1765 = vadd.f32 %v1641, %v1705
    %v1766 = vadd.f32 %v1642, %v1706
    %v1767 = vadd.f32 %v1643, %v1707
    %v1768 = vadd.f32 %v1644, %v1708
    %v1769 = vadd.f32 %v1645, %v1709
    %v1770 = vadd.f32 %v1646, %v1710
    %v1771 = vadd.f32 %v1647, %v1711
    %v1772 = vadd.f32 %v1648, %v1712
    %v1773 = vadd.f32 %v1649, %v1713
    %v1774 = vadd.f32 %v1650, %v1714
    %v1775 = vadd.f32 %v1651, %v1715
    %v1776 = vadd.f32 %v1652, %v1716
    %v1777 = vadd.f32 %v1653, %v1717
    %v1778 = vadd.f32 %v1654, %v1718
    %v1779 = vadd.f32 %v1655, %v1719
    %v1780 = vadd.f32 %v1656, %v1720
    %v1781 = vadd.f32 %v1657, %v1721
    %v1782 = vadd.f32 %v1658, %v1722
    %v1783 = vadd.f32 %v1659, %v1723
    %v1784 = vadd.f32 %v1660, %v1724
    %v1785 = vadd.f32 %v1661, %v1725
    %v1786 = vadd.f32 %v1662, %v1726
    %v1787 = vadd.f32 %v1663, %v1727
    %v1788 = vadd.f32 %v1664, %v1728
    %v1789 = vadd.f32 %v1665, %v1729
    %v1790 = vadd.f32 %v1666, %v1730
    %v1791 = vadd.f32 %v1667, %v1731
    %v1792 = vadd.f32 %v1668, %v1732
    %v1793 = vadd.f32 %v1669, %v1733
    %v1794 = vadd.f32 %v1670, %v1734
    %v1795 = vadd.f32 %v1671, %v1735
    %v1796 = vadd.f32 %v1672, %v1736
    %v1797 = vadd.f32 %v1673, %v1737
    %v1798 = vadd.f32 %v1674, %v1738
    %v1799 = vadd.f32 %v1675, %v1739
    %v1800 = vadd.f32 %v1676, %v1740
    %v1801 = vadd.f32 %v1677, %v1741
    %v1802 = vadd.f32 %v1678, %v1742
    %v1803 = vadd.f32 %v1679, %v1743
    %v1804 = vadd.f32 %v1680, %v1744
    %v1805 = vadd.f32 %v1681, %v1745
    %v1806 = vadd.f32 %v1682, %v1746
    %v1807 = vadd.f32 %v1683, %v1747
    %v1808 = vadd.f32 %v1684, %v1748
    %v1809 = vadd.f32 %v1685, %v1749
    %v1810 = vadd.f32 %v1686, %v1750
    %v1811 = vadd.f32 %v1687, %v1751
    %v1812 = vadd.f32 %v1688, %v1752
    %v1813 = vadd.f32 %v1689, %v1753
    %v1814 = vadd.f32 %v1690, %v1754
    %v1815 = vadd.f32 %v1691, %v1755
    %v1816 = vadd.f32 %v1692, %v1756
    %v1817 = vadd.f32 %v1693, %v1757
    %v1818 = vadd.f32 %v1694, %v1758
    %v1819 = vadd.f32 %v1695, %v1759
    %v1820 = vadd.f32 %v1448, %v1760
    %v1821 = vadd.f32 %v1449, %v1761
    %v1822 = vadd.f32 %v1450, %v1762
    %v1823 = vadd.f32 %v1451, %v1763
    %v1824 = vadd.f32 %v1452, %v1764
    %v1825 = vadd.f32 %v1453, %v1765
    %v1826 = vadd.f32 %v1454, %v1766
    %v1827 = vadd.f32 %v1455, %v1767
    %v1828 = vadd.f32 %v1456, %v1768
    %v1829 = vadd.f32 %v1457, %v1769
    %v1830 = vadd.f32 %v1458, %v1770
    %v1831 = vadd.f32 %v1459, %v1771
    %v1832 = vadd.f32 %v1460, %v1772
    %v1833 = vadd.f32 %v1461, %v1773
    %v1834 = vadd.f32 %v1462, %v1774
    %v1835 = vadd.f32 %v1463, %v1775
    %v1836 = vadd.f32 %v1464, %v1776
    %v1837 = vadd.f32 %v1465, %v1777
    %v1838 = vadd.f32 %v1466, %v1778
    %v1839 = vadd.f32 %v1467, %v1779
    %v1840 = vadd.f32 %v1468, %v1780
    %v1841 = vadd.f32 %v1469, %v1781
    %v1842 = vadd.f32 %v1470, %v1782
    %v1843 = vadd.f32 %v1471, %v1783
    %v1844 = vadd.f32 %v1472, %v1784
    %v1845 = vadd.f32 %v1473, %v1785
    %v1846 = vadd.f32 %v1474, %v1786
    %v1847 = vadd.f32 %v1475, %v1787
    %v1848 = vadd.f32 %v1476, %v1788
    %v1849 = vadd.f32 %v1477, %v1789
    %v1850 = vadd.f32 %v1478, %v1790
    %v1851 = vadd.f32 %v1479, %v1791
    %v1852 = vadd.f32 %v1480, %v1792
    %v1853 = vadd.f32 %v1481, %v1793
    %v1854 = vadd.f32 %v1482, %v1794
    %v1855 = vadd.f32 %v1483, %v1795
    %v1856 = vadd.f32 %v1484, %v1796
    %v1857 = vadd.f32 %v1485, %v1797
    %v1858 = vadd.f32 %v1486, %v1798
    %v1859 = vadd.f32 %v1487, %v1799
    %v1860 = vadd.f32 %v1488, %v1800
    %v1861 = vadd.f32 %v1489, %v1801
    %v1862 = vadd.f32 %v1490, %v1802
    %v1863 = vadd.f32 %v1491, %v1803
    %v1864 = vadd.f32 %v1492, %v1804
    %v1865 = vadd.f32 %v1493, %v1805
    %v1866 = vadd.f32 %v1494, %v1806
    %v1867 = vadd.f32 %v1495, %v1807
    %v1868 = vadd.f32 %v1496, %v1808
    %v1869 = vadd.f32 %v1497, %v1809
    %v1870 = vadd.f32 %v1498, %v1810
    %v1871 = vadd.f32 %v1499, %v1811
    %v1872 = vadd.f32 %v1500, %v1812
    %v1873 = vadd.f32 %v1501, %v1813
    %v1874 = vadd.f32 %v1502, %v1814
    %v1875 = vadd.f32 %v1503, %v1815
    %v1876 = vadd.f32 %v1504, %v1816
    %v1877 = vadd.f32 %v1505, %v1817
    %v1878 = vadd.f32 %v1506, %v1818
    %v1879 = vadd.f32 %v1507, %v1819
    %1880 = vst [vmem:[#allocation2] sm:$0xff] %v1820
    %1881 = vst [vmem:[#allocation2 + $0x8] sm:$0xff] %v1821
    %1882 = vst [vmem:[#allocation2 + $0x10] sm:$0xff] %v1822
    %1883 = vst [vmem:[#allocation2 + $0x18] sm:$0xff] %v1823
    %1884 = vst [vmem:[#allocation2 + $0x20] sm:$0xff] %v1824
    %1885 = vst [vmem:[#allocation2 + $0x28] sm:$0xff] %v1825
    %1886 = vst [vmem:[#allocation2 + $0x30] sm:$0xff] %v1826
    %1887 = vst [vmem:[#allocation2 + $0x38] sm:$0xff] %v1827
    %1888 = vst [vmem:[#allocation2 + $0x40] sm:$0xff] %v1828
    %1889 = vst [vmem:[#allocation2 + $0x48] sm:$0xff] %v1829
    %1890 = vst [vmem:[#allocation2 + $0x50] sm:$0xff] %v1830
    %1891 = vst [vmem:[#allocation2 + $0x58] sm:$0xff] %v1831
    %1892 = vst [vmem:[#allocation2 + $0x60] sm:$0xff] %v1832
    %1893 = vst [vmem:[#allocation2 + $0x68] sm:$0xff] %v1833
    %1894 = vst [vmem:[#allocation2 + $0x70] sm:$0xff] %v1834
    %1895 = vst [vmem:[#allocation2 + $0x78] sm:$0xff] %v1835
    %1896 = vst [vmem:[#allocation2 + $0x80] sm:$0xff] %v1836
    %1897 = vst [vmem:[#allocation2 + $0x88] sm:$0xff] %v1837
    %1898 = vst [vmem:[#allocation2 + $0x90] sm:$0xff] %v1838
    %1899 = vst [vmem:[#allocation2 + $0x98] sm:$0xff] %v1839
    %1900 = vst [vmem:[#allocation2 + $0xa0] sm:$0xff] %v1840
    %1901 = vst [vmem:[#allocation2 + $0xa8] sm:$0xff] %v1841
    %1902 = vst [vmem:[#allocation2 + $0xb0] sm:$0xff] %v1842
    %1903 = vst [vmem:[#allocation2 + $0xb8] sm:$0xff] %v1843
    %1904 = vst [vmem:[#allocation2 + $0xc0] sm:$0xff] %v1844
    %1905 = vst [vmem:[#allocation2 + $0xc8] sm:$0xff] %v1845
    %1906 = vst [vmem:[#allocation2 + $0xd0] sm:$0xff] %v1846
    %1907 = vst [vmem:[#allocation2 + $0xd8] sm:$0xff] %v1847
    %1908 = vst [vmem:[#allocation2 + $0xe0] sm:$0xff] %v1848
    %1909 = vst [vmem:[#allocation2 + $0xe8] sm:$0xff] %v1849
    %1910 = vst [vmem:[#allocation2 + $0x100] sm:$0xff] %v1850
    %1911 = vst [vmem:[#allocation2 + $0x108] sm:$0xff] %v1851
    %1912 = vst [vmem:[#allocation2 + $0x110] sm:$0xff] %v1852
    %1913 = vst [vmem:[#allocation2 + $0x118] sm:$0xff] %v1853
    %1914 = vst [vmem:[#allocation2 + $0x120] sm:$0xff] %v1854
    %1915 = vst [vmem:[#allocation2 + $0x128] sm:$0xff] %v1855
    %1916 = vst [vmem:[#allocation2 + $0x130] sm:$0xff] %v1856
    %1917 = vst [vmem:[#allocation2 + $0x138] sm:$0xff] %v1857
    %1918 = vst [vmem:[#allocation2 + $0x140] sm:$0xff] %v1858
    %1919 = vst [vmem:[#allocation2 + $0x148] sm:$0xff] %v1859
    %1920 = vst [vmem:[#allocation2 + $0x150] sm:$0xff] %v1860
    %1921 = vst [vmem:[#allocation2 + $0x158] sm:$0xff] %v1861
    %1922 = vst [vmem:[#allocation2 + $0x160] sm:$0xff] %v1862
    %1923 = vst [vmem:[#allocation2 + $0x168] sm:$0xff] %v1863
    %1924 = vst [vmem:[#allocation2 + $0x170] sm:$0xff] %v1864
    %1925 = vst [vmem:[#allocation2 + $0x178] sm:$0xff] %v1865
    %1926 = vst [vmem:[#allocation2 + $0x180] sm:$0xff] %v1866
    %1927 = vst [vmem:[#allocation2 + $0x188] sm:$0xff] %v1867
    %1928 = vst [vmem:[#allocation2 + $0x190] sm:$0xff] %v1868
    %1929 = vst [vmem:[#allocation2 + $0x198] sm:$0xff] %v1869
    %1930 = vst [vmem:[#allocation2 + $0x1a0] sm:$0xff] %v1870
    %1931 = vst [vmem:[#allocation2 + $0x1a8] sm:$0xff] %v1871
    %1932 = vst [vmem:[#allocation2 + $0x1b0] sm:$0xff] %v1872
    %1933 = vst [vmem:[#allocation2 + $0x1b8] sm:$0xff] %v1873
    %1934 = vst [vmem:[#allocation2 + $0x1c0] sm:$0xff] %v1874
    %1935 = vst [vmem:[#allocation2 + $0x1c8] sm:$0xff] %v1875
    %1936 = vst [vmem:[#allocation2 + $0x1d0] sm:$0xff] %v1876
    %1937 = vst [vmem:[#allocation2 + $0x1d8] sm:$0xff] %v1877
    %1938 = vst [vmem:[#allocation2 + $0x1e0] sm:$0xff] %v1878
    %1939 = vst [vmem:[#allocation2 + $0x1e8] sm:$0xff] %v1879
    %v1940 = vld [vmem:[#allocation2] sm:$0xff]
    %v1941 = vld [vmem:[#allocation2 + $0x8] sm:$0xff]
    %v1942 = vld [vmem:[#allocation2 + $0x10] sm:$0xff]
    %v1943 = vld [vmem:[#allocation2 + $0x18] sm:$0xff]
    %v1944 = vld [vmem:[#allocation2 + $0x20] sm:$0xff]
    %v1945 = vld [vmem:[#allocation2 + $0x28] sm:$0xff]
    %v1946 = vld [vmem:[#allocation2 + $0x30] sm:$0xff]
    %v1947 = vld [vmem:[#allocation2 + $0x38] sm:$0xff]
    %v1948 = vld [vmem:[#allocation2 + $0x40] sm:$0xff]
    %v1949 = vld [vmem:[#allocation2 + $0x48] sm:$0xff]
    %v1950 = vld [vmem:[#allocation2 + $0x50] sm:$0xff]
    %v1951 = vld [vmem:[#allocation2 + $0x58] sm:$0xff]
    %v1952 = vld [vmem:[#allocation2 + $0x60] sm:$0xff]
    %v1953 = vld [vmem:[#allocation2 + $0x68] sm:$0xff]
    %v1954 = vld [vmem:[#allocation2 + $0x70] sm:$0xff]
    %v1955 = vld [vmem:[#allocation2 + $0x78] sm:$0xff]
    %v1956 = vld [vmem:[#allocation2 + $0x80] sm:$0xff]
    %v1957 = vld [vmem:[#allocation2 + $0x88] sm:$0xff]
    %v1958 = vld [vmem:[#allocation2 + $0x90] sm:$0xff]
    %v1959 = vld [vmem:[#allocation2 + $0x98] sm:$0xff]
    %v1960 = vld [vmem:[#allocation2 + $0xa0] sm:$0xff]
    %v1961 = vld [vmem:[#allocation2 + $0xa8] sm:$0xff]
    %v1962 = vld [vmem:[#allocation2 + $0xb0] sm:$0xff]
    %v1963 = vld [vmem:[#allocation2 + $0xb8] sm:$0xff]
    %v1964 = vld [vmem:[#allocation2 + $0xc0] sm:$0xff]
    %v1965 = vld [vmem:[#allocation2 + $0xc8] sm:$0xff]
    %v1966 = vld [vmem:[#allocation2 + $0xd0] sm:$0xff]
    %v1967 = vld [vmem:[#allocation2 + $0xd8] sm:$0xff]
    %v1968 = vld [vmem:[#allocation2 + $0xe0] sm:$0xff]
    %v1969 = vld [vmem:[#allocation2 + $0xe8] sm:$0xff]
    %v1970 = vld [vmem:[#allocation2 + $0xf0] sm:$0xff]
    %v1971 = vld [vmem:[#allocation2 + $0xf8] sm:$0xff]
    %v1972 = vld [vmem:[#allocation2 + $0x100] sm:$0xff]
    %v1973 = vld [vmem:[#allocation2 + $0x108] sm:$0xff]
    %v1974 = vld [vmem:[#allocation2 + $0x110] sm:$0xff]
    %v1975 = vld [vmem:[#allocation2 + $0x118] sm:$0xff]
    %v1976 = vld [vmem:[#allocation2 + $0x120] sm:$0xff]
    %v1977 = vld [vmem:[#allocation2 + $0x128] sm:$0xff]
    %v1978 = vld [vmem:[#allocation2 + $0x130] sm:$0xff]
    %v1979 = vld [vmem:[#allocation2 + $0x138] sm:$0xff]
    %v1980 = vld [vmem:[#allocation2 + $0x140] sm:$0xff]
    %v1981 = vld [vmem:[#allocation2 + $0x148] sm:$0xff]
    %v1982 = vld [vmem:[#allocation2 + $0x150] sm:$0xff]
    %v1983 = vld [vmem:[#allocation2 + $0x158] sm:$0xff]
    %v1984 = vld [vmem:[#allocation2 + $0x160] sm:$0xff]
    %v1985 = vld [vmem:[#allocation2 + $0x168] sm:$0xff]
    %v1986 = vld [vmem:[#allocation2 + $0x170] sm:$0xff]
    %v1987 = vld [vmem:[#allocation2 + $0x178] sm:$0xff]
    %v1988 = vld [vmem:[#allocation2 + $0x180] sm:$0xff]
    %v1989 = vld [vmem:[#allocation2 + $0x188] sm:$0xff]
    %v1990 = vld [vmem:[#allocation2 + $0x190] sm:$0xff]
    %v1991 = vld [vmem:[#allocation2 + $0x198] sm:$0xff]
    %v1992 = vld [vmem:[#allocation2 + $0x1a0] sm:$0xff]
    %v1993 = vld [vmem:[#allocation2 + $0x1a8] sm:$0xff]
    %v1994 = vld [vmem:[#allocation2 + $0x1b0] sm:$0xff]
    %v1995 = vld [vmem:[#allocation2 + $0x1b8] sm:$0xff]
    %v1996 = vld [vmem:[#allocation2 + $0x1c0] sm:$0xff]
    %v1997 = vld [vmem:[#allocation2 + $0x1c8] sm:$0xff]
    %v1998 = vld [vmem:[#allocation2 + $0x1d0] sm:$0xff]
    %v1999 = vld [vmem:[#allocation2 + $0x1d8] sm:$0xff]
    %v2000 = vld [vmem:[#allocation2 + $0x1e0] sm:$0xff]
    %v2001 = vld [vmem:[#allocation2 + $0x1e8] sm:$0xff]
    %v2002 = vld [vmem:[#allocation2 + $0x1f0] sm:$0xff]
    %v2003 = vld [vmem:[#allocation2 + $0x1f8] sm:$0xff]
    %v2004 = vld [vmem:[%s2] sm:$0x1]
    %v2006 = vlaneseq
    %v2007 = vshrl.u32 %v2006, 7
    %v2008 = vsub.s32 0, %v2007
    %v2009 = vrot.slane %v2004, %v2008
    %v2011 = vadd.f32 %v1940, %v2009
    %v2012 = vadd.f32 %v1941, %v2009
    %v2013 = vadd.f32 %v1942, %v2009
    %v2014 = vadd.f32 %v1943, %v2009
    %v2015 = vadd.f32 %v1944, %v2009
    %v2016 = vadd.f32 %v1945, %v2009
    %v2017 = vadd.f32 %v1946, %v2009
    %v2018 = vadd.f32 %v1947, %v2009
    %v2019 = vadd.f32 %v1948, %v2009
    %v2020 = vadd.f32 %v1949, %v2009
    %v2021 = vadd.f32 %v1950, %v2009
    %v2022 = vadd.f32 %v1951, %v2009
    %v2023 = vadd.f32 %v1952, %v2009
    %v2024 = vadd.f32 %v1953, %v2009
    %v2025 = vadd.f32 %v1954, %v2009
    %v2026 = vadd.f32 %v1955, %v2009
    %v2027 = vadd.f32 %v1956, %v2009
    %v2028 = vadd.f32 %v1957, %v2009
    %v2029 = vadd.f32 %v1958, %v2009
    %v2030 = vadd.f32 %v1959, %v2009
    %v2031 = vadd.f32 %v1960, %v2009
    %v2032 = vadd.f32 %v1961, %v2009
    %v2033 = vadd.f32 %v1962, %v2009
    %v2034 = vadd.f32 %v1963, %v2009
    %v2035 = vadd.f32 %v1964, %v2009
    %v2036 = vadd.f32 %v1965, %v2009
    %v2037 = vadd.f32 %v1966, %v2009
    %v2038 = vadd.f32 %v1967, %v2009
    %v2039 = vadd.f32 %v1968, %v2009
    %v2040 = vadd.f32 %v1969, %v2009
    %v2041 = vadd.f32 %v1970, %v2009
    %v2042 = vadd.f32 %v1971, %v2009
    %v2043 = vadd.f32 %v1972, %v2009
    %v2044 = vadd.f32 %v1973, %v2009
    %v2045 = vadd.f32 %v1974, %v2009
    %v2046 = vadd.f32 %v1975, %v2009
    %v2047 = vadd.f32 %v1976, %v2009
    %v2048 = vadd.f32 %v1977, %v2009
    %v2049 = vadd.f32 %v1978, %v2009
    %v2050 = vadd.f32 %v1979, %v2009
    %v2051 = vadd.f32 %v1980, %v2009
    %v2052 = vadd.f32 %v1981, %v2009
    %v2053 = vadd.f32 %v1982, %v2009
    %v2054 = vadd.f32 %v1983, %v2009
    %v2055 = vadd.f32 %v1984, %v2009
    %v2056 = vadd.f32 %v1985, %v2009
    %v2057 = vadd.f32 %v1986, %v2009
    %v2058 = vadd.f32 %v1987, %v2009
    %v2059 = vadd.f32 %v1988, %v2009
    %v2060 = vadd.f32 %v1989, %v2009
    %v2061 = vadd.f32 %v1990, %v2009
    %v2062 = vadd.f32 %v1991, %v2009
    %v2063 = vadd.f32 %v1992, %v2009
    %v2064 = vadd.f32 %v1993, %v2009
    %v2065 = vadd.f32 %v1994, %v2009
    %v2066 = vadd.f32 %v1995, %v2009
    %v2067 = vadd.f32 %v1996, %v2009
    %v2068 = vadd.f32 %v1997, %v2009
    %v2069 = vadd.f32 %v1998, %v2009
    %v2070 = vadd.f32 %v1999, %v2009
    %v2071 = vadd.f32 %v2000, %v2009
    %v2072 = vadd.f32 %v2001, %v2009
    %v2073 = vadd.f32 %v2002, %v2009
    %v2074 = vadd.f32 %v2003, %v2009
    %2075 = vst [vmem:[#allocation8] sm:$0xff] %v2011
    %2076 = vst [vmem:[#allocation8 + $0x8] sm:$0xff] %v2012
    %2077 = vst [vmem:[#allocation8 + $0x10] sm:$0xff] %v2013
    %2078 = vst [vmem:[#allocation8 + $0x18] sm:$0xff] %v2014
    %2079 = vst [vmem:[#allocation8 + $0x20] sm:$0xff] %v2015
    %2080 = vst [vmem:[#allocation8 + $0x28] sm:$0xff] %v2016
    %2081 = vst [vmem:[#allocation8 + $0x30] sm:$0xff] %v2017
    %2082 = vst [vmem:[#allocation8 + $0x38] sm:$0xff] %v2018
    %2083 = vst [vmem:[#allocation8 + $0x40] sm:$0xff] %v2019
    %2084 = vst [vmem:[#allocation8 + $0x48] sm:$0xff] %v2020
    %2085 = vst [vmem:[#allocation8 + $0x50] sm:$0xff] %v2021
    %2086 = vst [vmem:[#allocation8 + $0x58] sm:$0xff] %v2022
    %2087 = vst [vmem:[#allocation8 + $0x60] sm:$0xff] %v2023
    %2088 = vst [vmem:[#allocation8 + $0x68] sm:$0xff] %v2024
    %2089 = vst [vmem:[#allocation8 + $0x70] sm:$0xff] %v2025
    %2090 = vst [vmem:[#allocation8 + $0x78] sm:$0xff] %v2026
    %2091 = vst [vmem:[#allocation8 + $0x80] sm:$0xff] %v2027
    %2092 = vst [vmem:[#allocation8 + $0x88] sm:$0xff] %v2028
    %2093 = vst [vmem:[#allocation8 + $0x90] sm:$0xff] %v2029
    %2094 = vst [vmem:[#allocation8 + $0x98] sm:$0xff] %v2030
    %2095 = vst [vmem:[#allocation8 + $0xa0] sm:$0xff] %v2031
    %2096 = vst [vmem:[#allocation8 + $0xa8] sm:$0xff] %v2032
    %2097 = vst [vmem:[#allocation8 + $0xb0] sm:$0xff] %v2033
    %2098 = vst [vmem:[#allocation8 + $0xb8] sm:$0xff] %v2034
    %2099 = vst [vmem:[#allocation8 + $0xc0] sm:$0xff] %v2035
    %2100 = vst [vmem:[#allocation8 + $0xc8] sm:$0xff] %v2036
    %2101 = vst [vmem:[#allocation8 + $0xd0] sm:$0xff] %v2037
    %2102 = vst [vmem:[#allocation8 + $0xd8] sm:$0xff] %v2038
    %2103 = vst [vmem:[#allocation8 + $0xe0] sm:$0xff] %v2039
    %2104 = vst [vmem:[#allocation8 + $0xe8] sm:$0xff] %v2040
    %2105 = vst [vmem:[#allocation8 + $0xf0] sm:$0xff] %v2041
    %2106 = vst [vmem:[#allocation8 + $0xf8] sm:$0xff] %v2042
    %2107 = vst [vmem:[#allocation8 + $0x100] sm:$0xff] %v2043
    %2108 = vst [vmem:[#allocation8 + $0x108] sm:$0xff] %v2044
    %2109 = vst [vmem:[#allocation8 + $0x110] sm:$0xff] %v2045
    %2110 = vst [vmem:[#allocation8 + $0x118] sm:$0xff] %v2046
    %2111 = vst [vmem:[#allocation8 + $0x120] sm:$0xff] %v2047
    %2112 = vst [vmem:[#allocation8 + $0x128] sm:$0xff] %v2048
    %2113 = vst [vmem:[#allocation8 + $0x130] sm:$0xff] %v2049
    %2114 = vst [vmem:[#allocation8 + $0x138] sm:$0xff] %v2050
    %2115 = vst [vmem:[#allocation8 + $0x140] sm:$0xff] %v2051
    %2116 = vst [vmem:[#allocation8 + $0x148] sm:$0xff] %v2052
    %2117 = vst [vmem:[#allocation8 + $0x150] sm:$0xff] %v2053
    %2118 = vst [vmem:[#allocation8 + $0x158] sm:$0xff] %v2054
    %2119 = vst [vmem:[#allocation8 + $0x160] sm:$0xff] %v2055
    %2120 = vst [vmem:[#allocation8 + $0x168] sm:$0xff] %v2056
    %2121 = vst [vmem:[#allocation8 + $0x170] sm:$0xff] %v2057
    %2122 = vst [vmem:[#allocation8 + $0x178] sm:$0xff] %v2058
    %2123 = vst [vmem:[#allocation8 + $0x180] sm:$0xff] %v2059
    %2124 = vst [vmem:[#allocation8 + $0x188] sm:$0xff] %v2060
    %2125 = vst [vmem:[#allocation8 + $0x190] sm:$0xff] %v2061
    %2126 = vst [vmem:[#allocation8 + $0x198] sm:$0xff] %v2062
    %2127 = vst [vmem:[#allocation8 + $0x1a0] sm:$0xff] %v2063
    %2128 = vst [vmem:[#allocation8 + $0x1a8] sm:$0xff] %v2064
    %2129 = vst [vmem:[#allocation8 + $0x1b0] sm:$0xff] %v2065
    %2130 = vst [vmem:[#allocation8 + $0x1b8] sm:$0xff] %v2066
    %2131 = vst [vmem:[#allocation8 + $0x1c0] sm:$0xff] %v2067
    %2132 = vst [vmem:[#allocation8 + $0x1c8] sm:$0xff] %v2068
    %2133 = vst [vmem:[#allocation8 + $0x1d0] sm:$0xff] %v2069
    %2134 = vst [vmem:[#allocation8 + $0x1d8] sm:$0xff] %v2070
    %2135 = vst [vmem:[#allocation8 + $0x1e0] sm:$0xff] %v2071
    %2136 = vst [vmem:[#allocation8 + $0x1e8] sm:$0xff] %v2072
    %2137 = vst [vmem:[#allocation8 + $0x1f0] sm:$0xff] %v2073
    %2138 = vst [vmem:[#allocation8 + $0x1f8] sm:$0xff] %v2074
    // Predicated region
    $region22: #{tpu_custom_call.1} parent=1 // pred_check
      _
    $region23: #{tpu_custom_call.1} parent=1 // pred_check_branch
      %2140 = sbr.rel (0) target = $region25
    $region24: #{tpu_custom_call.1} parent=1 // pred_region
      %s2142 = ssub.s32 8192, 8192
      %2143 = vsyncadd [#allocation5], %s2142
      %s2144 = sshll.u32 [#allocation8], 4
      %s2145 = int_to_ptr.vmem [resolvable:$true] %s2144
      %2150 = dma.vmem_to_hbm [thread:$0]  %s2145, 8192, %s3, [#allocation5], 128, 128, 8
    $region25: #{tpu_custom_call.1} parent=1 // pred_fallthru
      _
    // Predicated region
    $region26: #{tpu_custom_call.1} parent=1 // pred_check
      _
    $region27: #{tpu_custom_call.1} parent=1 // pred_check_branch
      %2152 = sbr.rel (0) target = $region29
    $region28: #{tpu_custom_call.1} parent=1 // pred_region
      %2153 = dma.done [#allocation5], 8192
    $region29: #{tpu_custom_call.1} parent=1 // pred_fallthru
      _
    %2154 = vsyncpa [#allocation4], 1
    %2155 = vsyncpa [#allocation7], 1
    %2156 = vsyncpa [#allocation5], 1

</llo_original>
